<compile_context>
chip_gen: v5e
topology: v5e:2x2
jax: 0.10.0
libtpu: 0.0.40
codegen_flags: <defaults>
</compile_context>

<pallas_src>
import functools

import jax
import jax.numpy as jnp
from jax.experimental import pallas as pl
from jax.experimental.pallas import tpu as pltpu


def _patch_expand_kernel(x_ref, g_ref, b_ref, w_ref, cb_ref, o_ref, *,
                         H, W, Co, eps, slab_tile):
    """Fused LayerNorm + (stride==kernel) ConvTranspose3d + depth-to-space.

    x_ref : (slab_tile, H*W, C)      tokens of `slab_tile` depth-slices
    g_ref : (1, C)                   LayerNorm gamma
    b_ref : (1, C)                   LayerNorm beta
    w_ref : (C, 8*Co)                conv weight, columns ordered (kd, kh, kw, co)
    cb_ref: (1, 8*Co)                conv bias repeated per kernel position (f32)
    o_ref : (slab_tile, 2*H, 2*W*C)  output, memory order (kd, h | kh, w, kw, co)
    """
    C2 = 2 * Co  # == C, lane width of one (kd, kh) column group: (kw, co)

    # Hoisted once per grid step (stay in vregs across the slab loop).
    gamma = g_ref[...].astype(jnp.float32)          # (1, C)
    beta = b_ref[...].astype(jnp.float32)           # (1, C)
    wmat = w_ref[...]                               # (C, 8*Co)
    cbias = cb_ref[...]                             # (1, 8*Co) f32

    for j in range(slab_tile):
        x = x_ref[j].astype(jnp.float32)            # (H*W, C)

        # --- LayerNorm over channels (PyTorch: biased variance, eps inside sqrt)
        mu = jnp.mean(x, axis=-1, keepdims=True)
        xc = x - mu
        var = jnp.mean(xc * xc, axis=-1, keepdims=True)
        xn = xc * jax.lax.rsqrt(var + eps) * gamma + beta

        # --- ConvTranspose3d(k=2, s=2) as a per-token GEMM (MXU, f32 accumulate)
        y = jnp.dot(xn.astype(wmat.dtype), wmat,
                    preferred_element_type=jnp.float32) + cbias   # (H*W, 8*Co)

        # --- Depth-to-space scatter, fused into the output writes.
        # Split tokens back into (h, w); lane dim (8*Co) is untouched.
        y3 = y.reshape(H, W, 4 * C2)                # (H, W, 8*Co)
        for kd in range(2):
            for kh in range(2):
                q = 2 * kd + kh                     # column group (kd, kh)
                for wi in range(W):
                    o_ref[j,
                          kd * H:(kd + 1) * H,
                          (kh * W + wi) * C2:(kh * W + wi + 1) * C2] = (
                              y3[:, wi, q * C2:(q + 1) * C2].astype(o_ref.dtype))


def patch_expanding_pallas(x, ln_weight, ln_bias, up_weight, up_bias, *,
                           S, H, W, eps=1e-5, slab_tile=None,
                           cast_to_bf16=False, vmem_limit_bytes=None):
    """Forward of Patch_Expanding.

    x         : (B, L, C) with L = S*H*W
    ln_weight : (C,)   LayerNorm gamma
    ln_bias   : (C,)   LayerNorm beta
    up_weight : (C, C//2, 2, 2, 2)   ConvTranspose3d weight (PyTorch layout)
    up_bias   : (C//2,)              ConvTranspose3d bias
    returns   : (B, 8*L, C//2)
    """
    B, L, C = x.shape
    assert L == S * H * W, "input feature has wrong size"
    assert up_weight.shape[0] == C and up_weight.shape[2:] == (2, 2, 2)
    Co = up_weight.shape[1]
    HW = H * W
    BS = B * S
    out_dtype = x.dtype
    lane = 2 * W * C                      # output lane dim: (kh, w, kw, co)

    # ---- glue: free views / tiny parameter reshuffles only (no big HBM pass) -
    x3 = x.reshape(BS, HW, C)                                           # view
    # columns ordered (kd, kh, kw, co)
    w2d = jnp.transpose(up_weight, (0, 2, 3, 4, 1)).reshape(C, 8 * Co)
    cb2 = jnp.tile(up_bias.astype(jnp.float32), 8).reshape(1, 8 * Co)
    g2 = ln_weight.reshape(1, C)
    b2 = ln_bias.reshape(1, C)
    if cast_to_bf16:
        x3 = x3.astype(jnp.bfloat16)
        w2d = w2d.astype(jnp.bfloat16)

    # ---- tile size: group several depth-slabs per grid step ------------------
    if slab_tile is None:
        slab_out_bytes = (2 * H) * lane * jnp.dtype(out_dtype).itemsize
        slab_tile = 1
        for d in (8, 4, 2):
            # keep >=2 grid steps for megacore sharding, and blocks <= ~2 MiB
            if BS % d == 0 and BS // d >= 2 and d * slab_out_bytes <= (2 << 20):
                slab_tile = d
                break
    assert BS % slab_tile == 0, "slab_tile must divide B*S"
    grid = (BS // slab_tile,)

    kernel = functools.partial(_patch_expand_kernel, H=H, W=W, Co=Co,
                               eps=eps, slab_tile=slab_tile)
    cp = dict(dimension_semantics=("parallel",))
    if vmem_limit_bytes is not None:
        cp["vmem_limit_bytes"] = vmem_limit_bytes

    out = pl.pallas_call(
        kernel,
        out_shape=jax.ShapeDtypeStruct((BS, 2 * H, lane), out_dtype),
        grid_spec=pltpu.PrefetchScalarGridSpec(
            num_scalar_prefetch=0,
            grid=grid,
            in_specs=[
                pl.BlockSpec((slab_tile, HW, C), lambda i: (i, 0, 0)),
                pl.BlockSpec((1, C), lambda i: (0, 0)),
                pl.BlockSpec((1, C), lambda i: (0, 0)),
                pl.BlockSpec((C, 8 * Co), lambda i: (0, 0)),
                pl.BlockSpec((1, 8 * Co), lambda i: (0, 0)),
            ],
            out_specs=pl.BlockSpec((slab_tile, 2 * H, lane),
                                   lambda i: (i, 0, 0)),
        ),
        compiler_params=pltpu.CompilerParams(**cp),
    )(x3, g2, b2, w2d, cb2)

    # Memory order is already (b, s, kd, h, kh, w, kw, co) -> free reshape.
    return out.reshape(B, 8 * L, Co)


def _reference(x, ln_weight, ln_bias, up_weight, up_bias, *, S, H, W, eps=1e-5):
    """Pure-JAX reference mirroring the PyTorch module exactly."""
    B, L, C = x.shape
    Co = up_weight.shape[1]
    xv = x.reshape(B, S, H, W, C).astype(jnp.float32)
    mu = jnp.mean(xv, axis=-1, keepdims=True)
    var = jnp.mean((xv - mu) ** 2, axis=-1, keepdims=True)
    xn = (xv - mu) / jnp.sqrt(var + eps) * ln_weight + ln_bias
    # ConvTranspose3d with kernel == stride == 2; weight (C, Co, kd, kh, kw).
    y = jnp.einsum("bshwc,cnijk->bsihjwkn", xn, up_weight) + up_bias
    return y.reshape(B, 8 * L, Co)


if __name__ == "__main__":
    # Small shapes consistent with the module: dim=32 -> dim//2=16, tokens 4x4x4.
    B, S, H, W, dim = 2, 4, 4, 4, 32
    Co = dim // 2
    L = S * H * W

    key = jax.random.PRNGKey(0)
    kx, kg, kb, kw_, kc = jax.random.split(key, 5)
    x = jax.random.normal(kx, (B, L, dim), dtype=jnp.float32)
    ln_w = 1.0 + 0.1 * jax.random.normal(kg, (dim,), dtype=jnp.float32)
    ln_b = 0.1 * jax.random.normal(kb, (dim,), dtype=jnp.float32)
    up_w = 0.1 * jax.random.normal(kw_, (dim, Co, 2, 2, 2), dtype=jnp.float32)
    up_b = 0.1 * jax.random.normal(kc, (Co,), dtype=jnp.float32)

    fwd = jax.jit(functools.partial(patch_expanding_pallas, S=S, H=H, W=W))
    out = jax.block_until_ready(fwd(x, ln_w, ln_b, up_w, up_b))

    ref = _reference(x, ln_w, ln_b, up_w, up_b, S=S, H=H, W=W)
    assert out.shape == (B, 8 * L, Co), out.shape
    assert jnp.allclose(out, ref, atol=5e-4, rtol=5e-4), (
        "max abs diff = %f" % float(jnp.max(jnp.abs(out - ref))))

    print("KERNEL_OK")
</pallas_src>

<mosaic_0001>
module attributes {stable_mosaic.version = 11 : i64} {
  func.func @_patch_expand_kernel(%arg0: i32, %arg1: memref<4x16x32xf32, #tpu.memory_space<vmem>>, %arg2: memref<1x32xf32, #tpu.memory_space<vmem>>, %arg3: memref<1x32xf32, #tpu.memory_space<vmem>>, %arg4: memref<32x128xf32, #tpu.memory_space<vmem>>, %arg5: memref<1x128xf32, #tpu.memory_space<vmem>>, %arg6: memref<4x8x256xf32, #tpu.memory_space<vmem>>) attributes {dimension_semantics = [#tpu.dimension_semantics<parallel>], iteration_bounds = array<i64: 2>, scalar_prefetch = 0 : i64, scratch_operands = 0 : i64, tpu.core_type = #tpu.core_type<tc>, window_params = [{transform_indices = @transform_0, window_bounds = array<i64: 4, 16, 32>}, {pipeline_mode = #tpu.pipeline_mode<synchronous>, transform_indices = @transform_1, window_bounds = array<i64: 1, 32>}, {pipeline_mode = #tpu.pipeline_mode<synchronous>, transform_indices = @transform_2, window_bounds = array<i64: 1, 32>}, {pipeline_mode = #tpu.pipeline_mode<synchronous>, transform_indices = @transform_3, window_bounds = array<i64: 32, 128>}, {pipeline_mode = #tpu.pipeline_mode<synchronous>, transform_indices = @transform_4, window_bounds = array<i64: 1, 128>}, {transform_indices = @transform_5, window_bounds = array<i64: 4, 8, 256>}]} {
    %c0 = arith.constant 0 : index
    %c0_0 = arith.constant 0 : index
    %0 = vector.load %arg2[%c0, %c0_0] : memref<1x32xf32, #tpu.memory_space<vmem>>, vector<1x32xf32>
    %c0_1 = arith.constant 0 : index
    %c0_2 = arith.constant 0 : index
    %1 = vector.load %arg3[%c0_1, %c0_2] : memref<1x32xf32, #tpu.memory_space<vmem>>, vector<1x32xf32>
    %c0_3 = arith.constant 0 : index
    %c0_4 = arith.constant 0 : index
    %2 = vector.load %arg4[%c0_3, %c0_4] : memref<32x128xf32, #tpu.memory_space<vmem>>, vector<32x128xf32>
    %c0_5 = arith.constant 0 : index
    %c0_6 = arith.constant 0 : index
    %3 = vector.load %arg5[%c0_5, %c0_6] : memref<1x128xf32, #tpu.memory_space<vmem>>, vector<1x128xf32>
    %c0_7 = arith.constant 0 : index
    %c0_8 = arith.constant 0 : index
    %c0_9 = arith.constant 0 : index
    %4 = vector.load %arg1[%c0_7, %c0_8, %c0_9] : memref<4x16x32xf32, #tpu.memory_space<vmem>>, vector<1x16x32xf32>
    %5 = vector.shape_cast %4 : vector<1x16x32xf32> to vector<16x32xf32>
    %cst = arith.constant dense<0.000000e+00> : vector<16xf32>
    %6 = vector.multi_reduction <add>, %5, %cst [1] : vector<16x32xf32> to vector<16xf32>
    %7 = vector.shape_cast %6 : vector<16xf32> to vector<16x1xf32>
    %cst_10 = arith.constant 3.200000e+01 : f32
    %8 = vector.broadcast %cst_10 : f32 to vector<16x1xf32>
    %9 = arith.divf %7, %8 : vector<16x1xf32>
    %10 = vector.broadcast %9 : vector<16x1xf32> to vector<16x32xf32>
    %11 = arith.subf %5, %10 : vector<16x32xf32>
    %12 = arith.mulf %11, %11 : vector<16x32xf32>
    %cst_11 = arith.constant dense<0.000000e+00> : vector<16xf32>
    %13 = vector.multi_reduction <add>, %12, %cst_11 [1] : vector<16x32xf32> to vector<16xf32>
    %14 = vector.shape_cast %13 : vector<16xf32> to vector<16x1xf32>
    %cst_12 = arith.constant 3.200000e+01 : f32
    %15 = vector.broadcast %cst_12 : f32 to vector<16x1xf32>
    %16 = arith.divf %14, %15 : vector<16x1xf32>
    %cst_13 = arith.constant 9.99999974E-6 : f32
    %17 = vector.broadcast %cst_13 : f32 to vector<16x1xf32>
    %18 = arith.addf %16, %17 : vector<16x1xf32>
    %19 = math.rsqrt %18 : vector<16x1xf32>
    %20 = vector.broadcast %19 : vector<16x1xf32> to vector<16x32xf32>
    %21 = arith.mulf %11, %20 : vector<16x32xf32>
    %22 = vector.broadcast %0 : vector<1x32xf32> to vector<16x32xf32>
    %23 = arith.mulf %21, %22 : vector<16x32xf32>
    %24 = vector.broadcast %1 : vector<1x32xf32> to vector<16x32xf32>
    %25 = arith.addf %23, %24 : vector<16x32xf32>
    %cst_14 = arith.constant dense<0.000000e+00> : vector<16x128xf32>
    %26 = tpu.matmul %25, %2, %cst_14 {dimension_numbers = #tpu.dot_dimension_numbers<[1], [0], [0], [1], [0, 0, 1, 1], [], []>} : vector<16x32xf32>, vector<32x128xf32>, vector<16x128xf32> -> vector<16x128xf32>
    %27 = vector.broadcast %3 : vector<1x128xf32> to vector<16x128xf32>
    %28 = arith.addf %26, %27 : vector<16x128xf32>
    %29 = vector.shape_cast %28 : vector<16x128xf32> to vector<4x4x128xf32>
    %30 = vector.extract_strided_slice %29 {offsets = [0, 0, 0], sizes = [4, 1, 32], strides = [1, 1, 1]} : vector<4x4x128xf32> to vector<4x1x32xf32>
    %31 = vector.shape_cast %30 : vector<4x1x32xf32> to vector<4x32xf32>
    %c0_15 = arith.constant 0 : index
    %c0_16 = arith.constant 0 : index
    %c0_17 = arith.constant 0 : index
    %32 = vector.load %arg6[%c0_15, %c0_16, %c0_17] : memref<4x8x256xf32, #tpu.memory_space<vmem>>, vector<1x4x32xf32>
    %33 = vector.shape_cast %32 : vector<1x4x32xf32> to vector<4x32xf32>
    %34 = vector.shape_cast %31 : vector<4x32xf32> to vector<1x4x32xf32>
    tpu.vector_store %arg6[%c0_15, %c0_16, %c0_17], %34 {strides = array<i32>} : memref<4x8x256xf32, #tpu.memory_space<vmem>>, vector<1x4x32xf32>,
    %35 = vector.extract_strided_slice %29 {offsets = [0, 1, 0], sizes = [4, 1, 32], strides = [1, 1, 1]} : vector<4x4x128xf32> to vector<4x1x32xf32>
    %36 = vector.shape_cast %35 : vector<4x1x32xf32> to vector<4x32xf32>
    %c0_18 = arith.constant 0 : index
    %c0_19 = arith.constant 0 : index
    %c32 = arith.constant 32 : index
    %37 = vector.load %arg6[%c0_18, %c0_19, %c32] : memref<4x8x256xf32, #tpu.memory_space<vmem>>, vector<1x4x32xf32>
    %38 = vector.shape_cast %37 : vector<1x4x32xf32> to vector<4x32xf32>
    %39 = vector.shape_cast %36 : vector<4x32xf32> to vector<1x4x32xf32>
    tpu.vector_store %arg6[%c0_18, %c0_19, %c32], %39 {strides = array<i32>} : memref<4x8x256xf32, #tpu.memory_space<vmem>>, vector<1x4x32xf32>,
    %40 = vector.extract_strided_slice %29 {offsets = [0, 2, 0], sizes = [4, 1, 32], strides = [1, 1, 1]} : vector<4x4x128xf32> to vector<4x1x32xf32>
    %41 = vector.shape_cast %40 : vector<4x1x32xf32> to vector<4x32xf32>
    %c0_20 = arith.constant 0 : index
    %c0_21 = arith.constant 0 : index
    %c64 = arith.constant 64 : index
    %42 = vector.load %arg6[%c0_20, %c0_21, %c64] : memref<4x8x256xf32, #tpu.memory_space<vmem>>, vector<1x4x32xf32>
    %43 = vector.shape_cast %42 : vector<1x4x32xf32> to vector<4x32xf32>
    %44 = vector.shape_cast %41 : vector<4x32xf32> to vector<1x4x32xf32>
    tpu.vector_store %arg6[%c0_20, %c0_21, %c64], %44 {strides = array<i32>} : memref<4x8x256xf32, #tpu.memory_space<vmem>>, vector<1x4x32xf32>,
    %45 = vector.extract_strided_slice %29 {offsets = [0, 3, 0], sizes = [4, 1, 32], strides = [1, 1, 1]} : vector<4x4x128xf32> to vector<4x1x32xf32>
    %46 = vector.shape_cast %45 : vector<4x1x32xf32> to vector<4x32xf32>
    %c0_22 = arith.constant 0 : index
    %c0_23 = arith.constant 0 : index
    %c96 = arith.constant 96 : index
    %47 = vector.load %arg6[%c0_22, %c0_23, %c96] : memref<4x8x256xf32, #tpu.memory_space<vmem>>, vector<1x4x32xf32>
    %48 = vector.shape_cast %47 : vector<1x4x32xf32> to vector<4x32xf32>
    %49 = vector.shape_cast %46 : vector<4x32xf32> to vector<1x4x32xf32>
    tpu.vector_store %arg6[%c0_22, %c0_23, %c96], %49 {strides = array<i32>} : memref<4x8x256xf32, #tpu.memory_space<vmem>>, vector<1x4x32xf32>,
    %50 = vector.extract_strided_slice %29 {offsets = [0, 0, 32], sizes = [4, 1, 32], strides = [1, 1, 1]} : vector<4x4x128xf32> to vector<4x1x32xf32>
    %51 = vector.shape_cast %50 : vector<4x1x32xf32> to vector<4x32xf32>
    %c0_24 = arith.constant 0 : index
    %c0_25 = arith.constant 0 : index
    %c128 = arith.constant 128 : index
    %52 = vector.load %arg6[%c0_24, %c0_25, %c128] : memref<4x8x256xf32, #tpu.memory_space<vmem>>, vector<1x4x32xf32>
    %53 = vector.shape_cast %52 : vector<1x4x32xf32> to vector<4x32xf32>
    %54 = vector.shape_cast %51 : vector<4x32xf32> to vector<1x4x32xf32>
    tpu.vector_store %arg6[%c0_24, %c0_25, %c128], %54 {strides = array<i32>} : memref<4x8x256xf32, #tpu.memory_space<vmem>>, vector<1x4x32xf32>,
    %55 = vector.extract_strided_slice %29 {offsets = [0, 1, 32], sizes = [4, 1, 32], strides = [1, 1, 1]} : vector<4x4x128xf32> to vector<4x1x32xf32>
    %56 = vector.shape_cast %55 : vector<4x1x32xf32> to vector<4x32xf32>
    %c0_26 = arith.constant 0 : index
    %c0_27 = arith.constant 0 : index
    %c160 = arith.constant 160 : index
    %57 = vector.load %arg6[%c0_26, %c0_27, %c160] : memref<4x8x256xf32, #tpu.memory_space<vmem>>, vector<1x4x32xf32>
    %58 = vector.shape_cast %57 : vector<1x4x32xf32> to vector<4x32xf32>
    %59 = vector.shape_cast %56 : vector<4x32xf32> to vector<1x4x32xf32>
    tpu.vector_store %arg6[%c0_26, %c0_27, %c160], %59 {strides = array<i32>} : memref<4x8x256xf32, #tpu.memory_space<vmem>>, vector<1x4x32xf32>,
    %60 = vector.extract_strided_slice %29 {offsets = [0, 2, 32], sizes = [4, 1, 32], strides = [1, 1, 1]} : vector<4x4x128xf32> to vector<4x1x32xf32>
    %61 = vector.shape_cast %60 : vector<4x1x32xf32> to vector<4x32xf32>
    %c0_28 = arith.constant 0 : index
    %c0_29 = arith.constant 0 : index
    %c192 = arith.constant 192 : index
    %62 = vector.load %arg6[%c0_28, %c0_29, %c192] : memref<4x8x256xf32, #tpu.memory_space<vmem>>, vector<1x4x32xf32>
    %63 = vector.shape_cast %62 : vector<1x4x32xf32> to vector<4x32xf32>
    %64 = vector.shape_cast %61 : vector<4x32xf32> to vector<1x4x32xf32>
    tpu.vector_store %arg6[%c0_28, %c0_29, %c192], %64 {strides = array<i32>} : memref<4x8x256xf32, #tpu.memory_space<vmem>>, vector<1x4x32xf32>,
    %65 = vector.extract_strided_slice %29 {offsets = [0, 3, 32], sizes = [4, 1, 32], strides = [1, 1, 1]} : vector<4x4x128xf32> to vector<4x1x32xf32>
    %66 = vector.shape_cast %65 : vector<4x1x32xf32> to vector<4x32xf32>
    %c0_30 = arith.constant 0 : index
    %c0_31 = arith.constant 0 : index
    %c224 = arith.constant 224 : index
    %67 = vector.load %arg6[%c0_30, %c0_31, %c224] : memref<4x8x256xf32, #tpu.memory_space<vmem>>, vector<1x4x32xf32>
    %68 = vector.shape_cast %67 : vector<1x4x32xf32> to vector<4x32xf32>
    %69 = vector.shape_cast %66 : vector<4x32xf32> to vector<1x4x32xf32>
    tpu.vector_store %arg6[%c0_30, %c0_31, %c224], %69 {strides = array<i32>} : memref<4x8x256xf32, #tpu.memory_space<vmem>>, vector<1x4x32xf32>,
    %70 = vector.extract_strided_slice %29 {offsets = [0, 0, 64], sizes = [4, 1, 32], strides = [1, 1, 1]} : vector<4x4x128xf32> to vector<4x1x32xf32>
    %71 = vector.shape_cast %70 : vector<4x1x32xf32> to vector<4x32xf32>
    %c0_32 = arith.constant 0 : index
    %c4 = arith.constant 4 : index
    %c0_33 = arith.constant 0 : index
    %72 = vector.load %arg6[%c0_32, %c4, %c0_33] : memref<4x8x256xf32, #tpu.memory_space<vmem>>, vector<1x4x32xf32>
    %73 = vector.shape_cast %72 : vector<1x4x32xf32> to vector<4x32xf32>
    %74 = vector.shape_cast %71 : vector<4x32xf32> to vector<1x4x32xf32>
    tpu.vector_store %arg6[%c0_32, %c4, %c0_33], %74 {strides = array<i32>} : memref<4x8x256xf32, #tpu.memory_space<vmem>>, vector<1x4x32xf32>,
    %75 = vector.extract_strided_slice %29 {offsets = [0, 1, 64], sizes = [4, 1, 32], strides = [1, 1, 1]} : vector<4x4x128xf32> to vector<4x1x32xf32>
    %76 = vector.shape_cast %75 : vector<4x1x32xf32> to vector<4x32xf32>
    %c0_34 = arith.constant 0 : index
    %c4_35 = arith.constant 4 : index
    %c32_36 = arith.constant 32 : index
    %77 = vector.load %arg6[%c0_34, %c4_35, %c32_36] : memref<4x8x256xf32, #tpu.memory_space<vmem>>, vector<1x4x32xf32>
    %78 = vector.shape_cast %77 : vector<1x4x32xf32> to vector<4x32xf32>
    %79 = vector.shape_cast %76 : vector<4x32xf32> to vector<1x4x32xf32>
    tpu.vector_store %arg6[%c0_34, %c4_35, %c32_36], %79 {strides = array<i32>} : memref<4x8x256xf32, #tpu.memory_space<vmem>>, vector<1x4x32xf32>,
    %80 = vector.extract_strided_slice %29 {offsets = [0, 2, 64], sizes = [4, 1, 32], strides = [1, 1, 1]} : vector<4x4x128xf32> to vector<4x1x32xf32>
    %81 = vector.shape_cast %80 : vector<4x1x32xf32> to vector<4x32xf32>
    %c0_37 = arith.constant 0 : index
    %c4_38 = arith.constant 4 : index
    %c64_39 = arith.constant 64 : index
    %82 = vector.load %arg6[%c0_37, %c4_38, %c64_39] : memref<4x8x256xf32, #tpu.memory_space<vmem>>, vector<1x4x32xf32>
    %83 = vector.shape_cast %82 : vector<1x4x32xf32> to vector<4x32xf32>
    %84 = vector.shape_cast %81 : vector<4x32xf32> to vector<1x4x32xf32>
    tpu.vector_store %arg6[%c0_37, %c4_38, %c64_39], %84 {strides = array<i32>} : memref<4x8x256xf32, #tpu.memory_space<vmem>>, vector<1x4x32xf32>,
    %85 = vector.extract_strided_slice %29 {offsets = [0, 3, 64], sizes = [4, 1, 32], strides = [1, 1, 1]} : vector<4x4x128xf32> to vector<4x1x32xf32>
    %86 = vector.shape_cast %85 : vector<4x1x32xf32> to vector<4x32xf32>
    %c0_40 = arith.constant 0 : index
    %c4_41 = arith.constant 4 : index
    %c96_42 = arith.constant 96 : index
    %87 = vector.load %arg6[%c0_40, %c4_41, %c96_42] : memref<4x8x256xf32, #tpu.memory_space<vmem>>, vector<1x4x32xf32>
    %88 = vector.shape_cast %87 : vector<1x4x32xf32> to vector<4x32xf32>
    %89 = vector.shape_cast %86 : vector<4x32xf32> to vector<1x4x32xf32>
    tpu.vector_store %arg6[%c0_40, %c4_41, %c96_42], %89 {strides = array<i32>} : memref<4x8x256xf32, #tpu.memory_space<vmem>>, vector<1x4x32xf32>,
    %90 = vector.extract_strided_slice %29 {offsets = [0, 0, 96], sizes = [4, 1, 32], strides = [1, 1, 1]} : vector<4x4x128xf32> to vector<4x1x32xf32>
    %91 = vector.shape_cast %90 : vector<4x1x32xf32> to vector<4x32xf32>
    %c0_43 = arith.constant 0 : index
    %c4_44 = arith.constant 4 : index
    %c128_45 = arith.constant 128 : index
    %92 = vector.load %arg6[%c0_43, %c4_44, %c128_45] : memref<4x8x256xf32, #tpu.memory_space<vmem>>, vector<1x4x32xf32>
    %93 = vector.shape_cast %92 : vector<1x4x32xf32> to vector<4x32xf32>
    %94 = vector.shape_cast %91 : vector<4x32xf32> to vector<1x4x32xf32>
    tpu.vector_store %arg6[%c0_43, %c4_44, %c128_45], %94 {strides = array<i32>} : memref<4x8x256xf32, #tpu.memory_space<vmem>>, vector<1x4x32xf32>,
    %95 = vector.extract_strided_slice %29 {offsets = [0, 1, 96], sizes = [4, 1, 32], strides = [1, 1, 1]} : vector<4x4x128xf32> to vector<4x1x32xf32>
    %96 = vector.shape_cast %95 : vector<4x1x32xf32> to vector<4x32xf32>
    %c0_46 = arith.constant 0 : index
    %c4_47 = arith.constant 4 : index
    %c160_48 = arith.constant 160 : index
    %97 = vector.load %arg6[%c0_46, %c4_47, %c160_48] : memref<4x8x256xf32, #tpu.memory_space<vmem>>, vector<1x4x32xf32>
    %98 = vector.shape_cast %97 : vector<1x4x32xf32> to vector<4x32xf32>
    %99 = vector.shape_cast %96 : vector<4x32xf32> to vector<1x4x32xf32>
    tpu.vector_store %arg6[%c0_46, %c4_47, %c160_48], %99 {strides = array<i32>} : memref<4x8x256xf32, #tpu.memory_space<vmem>>, vector<1x4x32xf32>,
    %100 = vector.extract_strided_slice %29 {offsets = [0, 2, 96], sizes = [4, 1, 32], strides = [1, 1, 1]} : vector<4x4x128xf32> to vector<4x1x32xf32>
    %101 = vector.shape_cast %100 : vector<4x1x32xf32> to vector<4x32xf32>
    %c0_49 = arith.constant 0 : index
    %c4_50 = arith.constant 4 : index
    %c192_51 = arith.constant 192 : index
    %102 = vector.load %arg6[%c0_49, %c4_50, %c192_51] : memref<4x8x256xf32, #tpu.memory_space<vmem>>, vector<1x4x32xf32>
    %103 = vector.shape_cast %102 : vector<1x4x32xf32> to vector<4x32xf32>
    %104 = vector.shape_cast %101 : vector<4x32xf32> to vector<1x4x32xf32>
    tpu.vector_store %arg6[%c0_49, %c4_50, %c192_51], %104 {strides = array<i32>} : memref<4x8x256xf32, #tpu.memory_space<vmem>>, vector<1x4x32xf32>,
    %105 = vector.extract_strided_slice %29 {offsets = [0, 3, 96], sizes = [4, 1, 32], strides = [1, 1, 1]} : vector<4x4x128xf32> to vector<4x1x32xf32>
    %106 = vector.shape_cast %105 : vector<4x1x32xf32> to vector<4x32xf32>
    %c0_52 = arith.constant 0 : index
    %c4_53 = arith.constant 4 : index
    %c224_54 = arith.constant 224 : index
    %107 = vector.load %arg6[%c0_52, %c4_53, %c224_54] : memref<4x8x256xf32, #tpu.memory_space<vmem>>, vector<1x4x32xf32>
    %108 = vector.shape_cast %107 : vector<1x4x32xf32> to vector<4x32xf32>
    %109 = vector.shape_cast %106 : vector<4x32xf32> to vector<1x4x32xf32>
    tpu.vector_store %arg6[%c0_52, %c4_53, %c224_54], %109 {strides = array<i32>} : memref<4x8x256xf32, #tpu.memory_space<vmem>>, vector<1x4x32xf32>,
    %c1 = arith.constant 1 : index
    %c0_55 = arith.constant 0 : index
    %c0_56 = arith.constant 0 : index
    %110 = vector.load %arg1[%c1, %c0_55, %c0_56] : memref<4x16x32xf32, #tpu.memory_space<vmem>>, vector<1x16x32xf32>
    %111 = vector.shape_cast %110 : vector<1x16x32xf32> to vector<16x32xf32>
    %cst_57 = arith.constant dense<0.000000e+00> : vector<16xf32>
    %112 = vector.multi_reduction <add>, %111, %cst_57 [1] : vector<16x32xf32> to vector<16xf32>
    %113 = vector.shape_cast %112 : vector<16xf32> to vector<16x1xf32>
    %cst_58 = arith.constant 3.200000e+01 : f32
    %114 = vector.broadcast %cst_58 : f32 to vector<16x1xf32>
    %115 = arith.divf %113, %114 : vector<16x1xf32>
    %116 = vector.broadcast %115 : vector<16x1xf32> to vector<16x32xf32>
    %117 = arith.subf %111, %116 : vector<16x32xf32>
    %118 = arith.mulf %117, %117 : vector<16x32xf32>
    %cst_59 = arith.constant dense<0.000000e+00> : vector<16xf32>
    %119 = vector.multi_reduction <add>, %118, %cst_59 [1] : vector<16x32xf32> to vector<16xf32>
    %120 = vector.shape_cast %119 : vector<16xf32> to vector<16x1xf32>
    %cst_60 = arith.constant 3.200000e+01 : f32
    %121 = vector.broadcast %cst_60 : f32 to vector<16x1xf32>
    %122 = arith.divf %120, %121 : vector<16x1xf32>
    %cst_61 = arith.constant 9.99999974E-6 : f32
    %123 = vector.broadcast %cst_61 : f32 to vector<16x1xf32>
    %124 = arith.addf %122, %123 : vector<16x1xf32>
    %125 = math.rsqrt %124 : vector<16x1xf32>
    %126 = vector.broadcast %125 : vector<16x1xf32> to vector<16x32xf32>
    %127 = arith.mulf %117, %126 : vector<16x32xf32>
    %128 = vector.broadcast %0 : vector<1x32xf32> to vector<16x32xf32>
    %129 = arith.mulf %127, %128 : vector<16x32xf32>
    %130 = vector.broadcast %1 : vector<1x32xf32> to vector<16x32xf32>
    %131 = arith.addf %129, %130 : vector<16x32xf32>
    %cst_62 = arith.constant dense<0.000000e+00> : vector<16x128xf32>
    %132 = tpu.matmul %131, %2, %cst_62 {dimension_numbers = #tpu.dot_dimension_numbers<[1], [0], [0], [1], [0, 0, 1, 1], [], []>} : vector<16x32xf32>, vector<32x128xf32>, vector<16x128xf32> -> vector<16x128xf32>
    %133 = vector.broadcast %3 : vector<1x128xf32> to vector<16x128xf32>
    %134 = arith.addf %132, %133 : vector<16x128xf32>
    %135 = vector.shape_cast %134 : vector<16x128xf32> to vector<4x4x128xf32>
    %136 = vector.extract_strided_slice %135 {offsets = [0, 0, 0], sizes = [4, 1, 32], strides = [1, 1, 1]} : vector<4x4x128xf32> to vector<4x1x32xf32>
    %137 = vector.shape_cast %136 : vector<4x1x32xf32> to vector<4x32xf32>
    %c1_63 = arith.constant 1 : index
    %c0_64 = arith.constant 0 : index
    %c0_65 = arith.constant 0 : index
    %138 = vector.load %arg6[%c1_63, %c0_64, %c0_65] : memref<4x8x256xf32, #tpu.memory_space<vmem>>, vector<1x4x32xf32>
    %139 = vector.shape_cast %138 : vector<1x4x32xf32> to vector<4x32xf32>
    %140 = vector.shape_cast %137 : vector<4x32xf32> to vector<1x4x32xf32>
    tpu.vector_store %arg6[%c1_63, %c0_64, %c0_65], %140 {strides = array<i32>} : memref<4x8x256xf32, #tpu.memory_space<vmem>>, vector<1x4x32xf32>,
    %141 = vector.extract_strided_slice %135 {offsets = [0, 1, 0], sizes = [4, 1, 32], strides = [1, 1, 1]} : vector<4x4x128xf32> to vector<4x1x32xf32>
    %142 = vector.shape_cast %141 : vector<4x1x32xf32> to vector<4x32xf32>
    %c1_66 = arith.constant 1 : index
    %c0_67 = arith.constant 0 : index
    %c32_68 = arith.constant 32 : index
    %143 = vector.load %arg6[%c1_66, %c0_67, %c32_68] : memref<4x8x256xf32, #tpu.memory_space<vmem>>, vector<1x4x32xf32>
    %144 = vector.shape_cast %143 : vector<1x4x32xf32> to vector<4x32xf32>
    %145 = vector.shape_cast %142 : vector<4x32xf32> to vector<1x4x32xf32>
    tpu.vector_store %arg6[%c1_66, %c0_67, %c32_68], %145 {strides = array<i32>} : memref<4x8x256xf32, #tpu.memory_space<vmem>>, vector<1x4x32xf32>,
    %146 = vector.extract_strided_slice %135 {offsets = [0, 2, 0], sizes = [4, 1, 32], strides = [1, 1, 1]} : vector<4x4x128xf32> to vector<4x1x32xf32>
    %147 = vector.shape_cast %146 : vector<4x1x32xf32> to vector<4x32xf32>
    %c1_69 = arith.constant 1 : index
    %c0_70 = arith.constant 0 : index
    %c64_71 = arith.constant 64 : index
    %148 = vector.load %arg6[%c1_69, %c0_70, %c64_71] : memref<4x8x256xf32, #tpu.memory_space<vmem>>, vector<1x4x32xf32>
    %149 = vector.shape_cast %148 : vector<1x4x32xf32> to vector<4x32xf32>
    %150 = vector.shape_cast %147 : vector<4x32xf32> to vector<1x4x32xf32>
    tpu.vector_store %arg6[%c1_69, %c0_70, %c64_71], %150 {strides = array<i32>} : memref<4x8x256xf32, #tpu.memory_space<vmem>>, vector<1x4x32xf32>,
    %151 = vector.extract_strided_slice %135 {offsets = [0, 3, 0], sizes = [4, 1, 32], strides = [1, 1, 1]} : vector<4x4x128xf32> to vector<4x1x32xf32>
    %152 = vector.shape_cast %151 : vector<4x1x32xf32> to vector<4x32xf32>
    %c1_72 = arith.constant 1 : index
    %c0_73 = arith.constant 0 : index
    %c96_74 = arith.constant 96 : index
    %153 = vector.load %arg6[%c1_72, %c0_73, %c96_74] : memref<4x8x256xf32, #tpu.memory_space<vmem>>, vector<1x4x32xf32>
    %154 = vector.shape_cast %153 : vector<1x4x32xf32> to vector<4x32xf32>
    %155 = vector.shape_cast %152 : vector<4x32xf32> to vector<1x4x32xf32>
    tpu.vector_store %arg6[%c1_72, %c0_73, %c96_74], %155 {strides = array<i32>} : memref<4x8x256xf32, #tpu.memory_space<vmem>>, vector<1x4x32xf32>,
    %156 = vector.extract_strided_slice %135 {offsets = [0, 0, 32], sizes = [4, 1, 32], strides = [1, 1, 1]} : vector<4x4x128xf32> to vector<4x1x32xf32>
    %157 = vector.shape_cast %156 : vector<4x1x32xf32> to vector<4x32xf32>
    %c1_75 = arith.constant 1 : index
    %c0_76 = arith.constant 0 : index
    %c128_77 = arith.constant 128 : index
    %158 = vector.load %arg6[%c1_75, %c0_76, %c128_77] : memref<4x8x256xf32, #tpu.memory_space<vmem>>, vector<1x4x32xf32>
    %159 = vector.shape_cast %158 : vector<1x4x32xf32> to vector<4x32xf32>
    %160 = vector.shape_cast %157 : vector<4x32xf32> to vector<1x4x32xf32>
    tpu.vector_store %arg6[%c1_75, %c0_76, %c128_77], %160 {strides = array<i32>} : memref<4x8x256xf32, #tpu.memory_space<vmem>>, vector<1x4x32xf32>,
    %161 = vector.extract_strided_slice %135 {offsets = [0, 1, 32], sizes = [4, 1, 32], strides = [1, 1, 1]} : vector<4x4x128xf32> to vector<4x1x32xf32>
    %162 = vector.shape_cast %161 : vector<4x1x32xf32> to vector<4x32xf32>
    %c1_78 = arith.constant 1 : index
    %c0_79 = arith.constant 0 : index
    %c160_80 = arith.constant 160 : index
    %163 = vector.load %arg6[%c1_78, %c0_79, %c160_80] : memref<4x8x256xf32, #tpu.memory_space<vmem>>, vector<1x4x32xf32>
    %164 = vector.shape_cast %163 : vector<1x4x32xf32> to vector<4x32xf32>
    %165 = vector.shape_cast %162 : vector<4x32xf32> to vector<1x4x32xf32>
    tpu.vector_store %arg6[%c1_78, %c0_79, %c160_80], %165 {strides = array<i32>} : memref<4x8x256xf32, #tpu.memory_space<vmem>>, vector<1x4x32xf32>,
    %166 = vector.extract_strided_slice %135 {offsets = [0, 2, 32], sizes = [4, 1, 32], strides = [1, 1, 1]} : vector<4x4x128xf32> to vector<4x1x32xf32>
    %167 = vector.shape_cast %166 : vector<4x1x32xf32> to vector<4x32xf32>
    %c1_81 = arith.constant 1 : index
    %c0_82 = arith.constant 0 : index
    %c192_83 = arith.constant 192 : index
    %168 = vector.load %arg6[%c1_81, %c0_82, %c192_83] : memref<4x8x256xf32, #tpu.memory_space<vmem>>, vector<1x4x32xf32>
    %169 = vector.shape_cast %168 : vector<1x4x32xf32> to vector<4x32xf32>
    %170 = vector.shape_cast %167 : vector<4x32xf32> to vector<1x4x32xf32>
    tpu.vector_store %arg6[%c1_81, %c0_82, %c192_83], %170 {strides = array<i32>} : memref<4x8x256xf32, #tpu.memory_space<vmem>>, vector<1x4x32xf32>,
    %171 = vector.extract_strided_slice %135 {offsets = [0, 3, 32], sizes = [4, 1, 32], strides = [1, 1, 1]} : vector<4x4x128xf32> to vector<4x1x32xf32>
    %172 = vector.shape_cast %171 : vector<4x1x32xf32> to vector<4x32xf32>
    %c1_84 = arith.constant 1 : index
    %c0_85 = arith.constant 0 : index
    %c224_86 = arith.constant 224 : index
    %173 = vector.load %arg6[%c1_84, %c0_85, %c224_86] : memref<4x8x256xf32, #tpu.memory_space<vmem>>, vector<1x4x32xf32>
    %174 = vector.shape_cast %173 : vector<1x4x32xf32> to vector<4x32xf32>
    %175 = vector.shape_cast %172 : vector<4x32xf32> to vector<1x4x32xf32>
    tpu.vector_store %arg6[%c1_84, %c0_85, %c224_86], %175 {strides = array<i32>} : memref<4x8x256xf32, #tpu.memory_space<vmem>>, vector<1x4x32xf32>,
    %176 = vector.extract_strided_slice %135 {offsets = [0, 0, 64], sizes = [4, 1, 32], strides = [1, 1, 1]} : vector<4x4x128xf32> to vector<4x1x32xf32>
    %177 = vector.shape_cast %176 : vector<4x1x32xf32> to vector<4x32xf32>
    %c1_87 = arith.constant 1 : index
    %c4_88 = arith.constant 4 : index
    %c0_89 = arith.constant 0 : index
    %178 = vector.load %arg6[%c1_87, %c4_88, %c0_89] : memref<4x8x256xf32, #tpu.memory_space<vmem>>, vector<1x4x32xf32>
    %179 = vector.shape_cast %178 : vector<1x4x32xf32> to vector<4x32xf32>
    %180 = vector.shape_cast %177 : vector<4x32xf32> to vector<1x4x32xf32>
    tpu.vector_store %arg6[%c1_87, %c4_88, %c0_89], %180 {strides = array<i32>} : memref<4x8x256xf32, #tpu.memory_space<vmem>>, vector<1x4x32xf32>,
    %181 = vector.extract_strided_slice %135 {offsets = [0, 1, 64], sizes = [4, 1, 32], strides = [1, 1, 1]} : vector<4x4x128xf32> to vector<4x1x32xf32>
    %182 = vector.shape_cast %181 : vector<4x1x32xf32> to vector<4x32xf32>
    %c1_90 = arith.constant 1 : index
    %c4_91 = arith.constant 4 : index
    %c32_92 = arith.constant 32 : index
    %183 = vector.load %arg6[%c1_90, %c4_91, %c32_92] : memref<4x8x256xf32, #tpu.memory_space<vmem>>, vector<1x4x32xf32>
    %184 = vector.shape_cast %183 : vector<1x4x32xf32> to vector<4x32xf32>
    %185 = vector.shape_cast %182 : vector<4x32xf32> to vector<1x4x32xf32>
    tpu.vector_store %arg6[%c1_90, %c4_91, %c32_92], %185 {strides = array<i32>} : memref<4x8x256xf32, #tpu.memory_space<vmem>>, vector<1x4x32xf32>,
    %186 = vector.extract_strided_slice %135 {offsets = [0, 2, 64], sizes = [4, 1, 32], strides = [1, 1, 1]} : vector<4x4x128xf32> to vector<4x1x32xf32>
    %187 = vector.shape_cast %186 : vector<4x1x32xf32> to vector<4x32xf32>
    %c1_93 = arith.constant 1 : index
    %c4_94 = arith.constant 4 : index
    %c64_95 = arith.constant 64 : index
    %188 = vector.load %arg6[%c1_93, %c4_94, %c64_95] : memref<4x8x256xf32, #tpu.memory_space<vmem>>, vector<1x4x32xf32>
    %189 = vector.shape_cast %188 : vector<1x4x32xf32> to vector<4x32xf32>
    %190 = vector.shape_cast %187 : vector<4x32xf32> to vector<1x4x32xf32>
    tpu.vector_store %arg6[%c1_93, %c4_94, %c64_95], %190 {strides = array<i32>} : memref<4x8x256xf32, #tpu.memory_space<vmem>>, vector<1x4x32xf32>,
    %191 = vector.extract_strided_slice %135 {offsets = [0, 3, 64], sizes = [4, 1, 32], strides = [1, 1, 1]} : vector<4x4x128xf32> to vector<4x1x32xf32>
    %192 = vector.shape_cast %191 : vector<4x1x32xf32> to vector<4x32xf32>
    %c1_96 = arith.constant 1 : index
    %c4_97 = arith.constant 4 : index
    %c96_98 = arith.constant 96 : index
    %193 = vector.load %arg6[%c1_96, %c4_97, %c96_98] : memref<4x8x256xf32, #tpu.memory_space<vmem>>, vector<1x4x32xf32>
    %194 = vector.shape_cast %193 : vector<1x4x32xf32> to vector<4x32xf32>
    %195 = vector.shape_cast %192 : vector<4x32xf32> to vector<1x4x32xf32>
    tpu.vector_store %arg6[%c1_96, %c4_97, %c96_98], %195 {strides = array<i32>} : memref<4x8x256xf32, #tpu.memory_space<vmem>>, vector<1x4x32xf32>,
    %196 = vector.extract_strided_slice %135 {offsets = [0, 0, 96], sizes = [4, 1, 32], strides = [1, 1, 1]} : vector<4x4x128xf32> to vector<4x1x32xf32>
    %197 = vector.shape_cast %196 : vector<4x1x32xf32> to vector<4x32xf32>
    %c1_99 = arith.constant 1 : index
    %c4_100 = arith.constant 4 : index
    %c128_101 = arith.constant 128 : index
    %198 = vector.load %arg6[%c1_99, %c4_100, %c128_101] : memref<4x8x256xf32, #tpu.memory_space<vmem>>, vector<1x4x32xf32>
    %199 = vector.shape_cast %198 : vector<1x4x32xf32> to vector<4x32xf32>
    %200 = vector.shape_cast %197 : vector<4x32xf32> to vector<1x4x32xf32>
    tpu.vector_store %arg6[%c1_99, %c4_100, %c128_101], %200 {strides = array<i32>} : memref<4x8x256xf32, #tpu.memory_space<vmem>>, vector<1x4x32xf32>,
    %201 = vector.extract_strided_slice %135 {offsets = [0, 1, 96], sizes = [4, 1, 32], strides = [1, 1, 1]} : vector<4x4x128xf32> to vector<4x1x32xf32>
    %202 = vector.shape_cast %201 : vector<4x1x32xf32> to vector<4x32xf32>
    %c1_102 = arith.constant 1 : index
    %c4_103 = arith.constant 4 : index
    %c160_104 = arith.constant 160 : index
    %203 = vector.load %arg6[%c1_102, %c4_103, %c160_104] : memref<4x8x256xf32, #tpu.memory_space<vmem>>, vector<1x4x32xf32>
    %204 = vector.shape_cast %203 : vector<1x4x32xf32> to vector<4x32xf32>
    %205 = vector.shape_cast %202 : vector<4x32xf32> to vector<1x4x32xf32>
    tpu.vector_store %arg6[%c1_102, %c4_103, %c160_104], %205 {strides = array<i32>} : memref<4x8x256xf32, #tpu.memory_space<vmem>>, vector<1x4x32xf32>,
    %206 = vector.extract_strided_slice %135 {offsets = [0, 2, 96], sizes = [4, 1, 32], strides = [1, 1, 1]} : vector<4x4x128xf32> to vector<4x1x32xf32>
    %207 = vector.shape_cast %206 : vector<4x1x32xf32> to vector<4x32xf32>
    %c1_105 = arith.constant 1 : index
    %c4_106 = arith.constant 4 : index
    %c192_107 = arith.constant 192 : index
    %208 = vector.load %arg6[%c1_105, %c4_106, %c192_107] : memref<4x8x256xf32, #tpu.memory_space<vmem>>, vector<1x4x32xf32>
    %209 = vector.shape_cast %208 : vector<1x4x32xf32> to vector<4x32xf32>
    %210 = vector.shape_cast %207 : vector<4x32xf32> to vector<1x4x32xf32>
    tpu.vector_store %arg6[%c1_105, %c4_106, %c192_107], %210 {strides = array<i32>} : memref<4x8x256xf32, #tpu.memory_space<vmem>>, vector<1x4x32xf32>,
    %211 = vector.extract_strided_slice %135 {offsets = [0, 3, 96], sizes = [4, 1, 32], strides = [1, 1, 1]} : vector<4x4x128xf32> to vector<4x1x32xf32>
    %212 = vector.shape_cast %211 : vector<4x1x32xf32> to vector<4x32xf32>
    %c1_108 = arith.constant 1 : index
    %c4_109 = arith.constant 4 : index
    %c224_110 = arith.constant 224 : index
    %213 = vector.load %arg6[%c1_108, %c4_109, %c224_110] : memref<4x8x256xf32, #tpu.memory_space<vmem>>, vector<1x4x32xf32>
    %214 = vector.shape_cast %213 : vector<1x4x32xf32> to vector<4x32xf32>
    %215 = vector.shape_cast %212 : vector<4x32xf32> to vector<1x4x32xf32>
    tpu.vector_store %arg6[%c1_108, %c4_109, %c224_110], %215 {strides = array<i32>} : memref<4x8x256xf32, #tpu.memory_space<vmem>>, vector<1x4x32xf32>,
    %c2 = arith.constant 2 : index
    %c0_111 = arith.constant 0 : index
    %c0_112 = arith.constant 0 : index
    %216 = vector.load %arg1[%c2, %c0_111, %c0_112] : memref<4x16x32xf32, #tpu.memory_space<vmem>>, vector<1x16x32xf32>
    %217 = vector.shape_cast %216 : vector<1x16x32xf32> to vector<16x32xf32>
    %cst_113 = arith.constant dense<0.000000e+00> : vector<16xf32>
    %218 = vector.multi_reduction <add>, %217, %cst_113 [1] : vector<16x32xf32> to vector<16xf32>
    %219 = vector.shape_cast %218 : vector<16xf32> to vector<16x1xf32>
    %cst_114 = arith.constant 3.200000e+01 : f32
    %220 = vector.broadcast %cst_114 : f32 to vector<16x1xf32>
    %221 = arith.divf %219, %220 : vector<16x1xf32>
    %222 = vector.broadcast %221 : vector<16x1xf32> to vector<16x32xf32>
    %223 = arith.subf %217, %222 : vector<16x32xf32>
    %224 = arith.mulf %223, %223 : vector<16x32xf32>
    %cst_115 = arith.constant dense<0.000000e+00> : vector<16xf32>
    %225 = vector.multi_reduction <add>, %224, %cst_115 [1] : vector<16x32xf32> to vector<16xf32>
    %226 = vector.shape_cast %225 : vector<16xf32> to vector<16x1xf32>
    %cst_116 = arith.constant 3.200000e+01 : f32
    %227 = vector.broadcast %cst_116 : f32 to vector<16x1xf32>
    %228 = arith.divf %226, %227 : vector<16x1xf32>
    %cst_117 = arith.constant 9.99999974E-6 : f32
    %229 = vector.broadcast %cst_117 : f32 to vector<16x1xf32>
    %230 = arith.addf %228, %229 : vector<16x1xf32>
    %231 = math.rsqrt %230 : vector<16x1xf32>
    %232 = vector.broadcast %231 : vector<16x1xf32> to vector<16x32xf32>
    %233 = arith.mulf %223, %232 : vector<16x32xf32>
    %234 = vector.broadcast %0 : vector<1x32xf32> to vector<16x32xf32>
    %235 = arith.mulf %233, %234 : vector<16x32xf32>
    %236 = vector.broadcast %1 : vector<1x32xf32> to vector<16x32xf32>
    %237 = arith.addf %235, %236 : vector<16x32xf32>
    %cst_118 = arith.constant dense<0.000000e+00> : vector<16x128xf32>
    %238 = tpu.matmul %237, %2, %cst_118 {dimension_numbers = #tpu.dot_dimension_numbers<[1], [0], [0], [1], [0, 0, 1, 1], [], []>} : vector<16x32xf32>, vector<32x128xf32>, vector<16x128xf32> -> vector<16x128xf32>
    %239 = vector.broadcast %3 : vector<1x128xf32> to vector<16x128xf32>
    %240 = arith.addf %238, %239 : vector<16x128xf32>
    %241 = vector.shape_cast %240 : vector<16x128xf32> to vector<4x4x128xf32>
    %242 = vector.extract_strided_slice %241 {offsets = [0, 0, 0], sizes = [4, 1, 32], strides = [1, 1, 1]} : vector<4x4x128xf32> to vector<4x1x32xf32>
    %243 = vector.shape_cast %242 : vector<4x1x32xf32> to vector<4x32xf32>
    %c2_119 = arith.constant 2 : index
    %c0_120 = arith.constant 0 : index
    %c0_121 = arith.constant 0 : index
    %244 = vector.load %arg6[%c2_119, %c0_120, %c0_121] : memref<4x8x256xf32, #tpu.memory_space<vmem>>, vector<1x4x32xf32>
    %245 = vector.shape_cast %244 : vector<1x4x32xf32> to vector<4x32xf32>
    %246 = vector.shape_cast %243 : vector<4x32xf32> to vector<1x4x32xf32>
    tpu.vector_store %arg6[%c2_119, %c0_120, %c0_121], %246 {strides = array<i32>} : memref<4x8x256xf32, #tpu.memory_space<vmem>>, vector<1x4x32xf32>,
    %247 = vector.extract_strided_slice %241 {offsets = [0, 1, 0], sizes = [4, 1, 32], strides = [1, 1, 1]} : vector<4x4x128xf32> to vector<4x1x32xf32>
    %248 = vector.shape_cast %247 : vector<4x1x32xf32> to vector<4x32xf32>
    %c2_122 = arith.constant 2 : index
    %c0_123 = arith.constant 0 : index
    %c32_124 = arith.constant 32 : index
    %249 = vector.load %arg6[%c2_122, %c0_123, %c32_124] : memref<4x8x256xf32, #tpu.memory_space<vmem>>, vector<1x4x32xf32>
    %250 = vector.shape_cast %249 : vector<1x4x32xf32> to vector<4x32xf32>
    %251 = vector.shape_cast %248 : vector<4x32xf32> to vector<1x4x32xf32>
    tpu.vector_store %arg6[%c2_122, %c0_123, %c32_124], %251 {strides = array<i32>} : memref<4x8x256xf32, #tpu.memory_space<vmem>>, vector<1x4x32xf32>,
    %252 = vector.extract_strided_slice %241 {offsets = [0, 2, 0], sizes = [4, 1, 32], strides = [1, 1, 1]} : vector<4x4x128xf32> to vector<4x1x32xf32>
    %253 = vector.shape_cast %252 : vector<4x1x32xf32> to vector<4x32xf32>
    %c2_125 = arith.constant 2 : index
    %c0_126 = arith.constant 0 : index
    %c64_127 = arith.constant 64 : index
    %254 = vector.load %arg6[%c2_125, %c0_126, %c64_127] : memref<4x8x256xf32, #tpu.memory_space<vmem>>, vector<1x4x32xf32>
    %255 = vector.shape_cast %254 : vector<1x4x32xf32> to vector<4x32xf32>
    %256 = vector.shape_cast %253 : vector<4x32xf32> to vector<1x4x32xf32>
    tpu.vector_store %arg6[%c2_125, %c0_126, %c64_127], %256 {strides = array<i32>} : memref<4x8x256xf32, #tpu.memory_space<vmem>>, vector<1x4x32xf32>,
    %257 = vector.extract_strided_slice %241 {offsets = [0, 3, 0], sizes = [4, 1, 32], strides = [1, 1, 1]} : vector<4x4x128xf32> to vector<4x1x32xf32>
    %258 = vector.shape_cast %257 : vector<4x1x32xf32> to vector<4x32xf32>
    %c2_128 = arith.constant 2 : index
    %c0_129 = arith.constant 0 : index
    %c96_130 = arith.constant 96 : index
    %259 = vector.load %arg6[%c2_128, %c0_129, %c96_130] : memref<4x8x256xf32, #tpu.memory_space<vmem>>, vector<1x4x32xf32>
    %260 = vector.shape_cast %259 : vector<1x4x32xf32> to vector<4x32xf32>
    %261 = vector.shape_cast %258 : vector<4x32xf32> to vector<1x4x32xf32>
    tpu.vector_store %arg6[%c2_128, %c0_129, %c96_130], %261 {strides = array<i32>} : memref<4x8x256xf32, #tpu.memory_space<vmem>>, vector<1x4x32xf32>,
    %262 = vector.extract_strided_slice %241 {offsets = [0, 0, 32], sizes = [4, 1, 32], strides = [1, 1, 1]} : vector<4x4x128xf32> to vector<4x1x32xf32>
    %263 = vector.shape_cast %262 : vector<4x1x32xf32> to vector<4x32xf32>
    %c2_131 = arith.constant 2 : index
    %c0_132 = arith.constant 0 : index
    %c128_133 = arith.constant 128 : index
    %264 = vector.load %arg6[%c2_131, %c0_132, %c128_133] : memref<4x8x256xf32, #tpu.memory_space<vmem>>, vector<1x4x32xf32>
    %265 = vector.shape_cast %264 : vector<1x4x32xf32> to vector<4x32xf32>
    %266 = vector.shape_cast %263 : vector<4x32xf32> to vector<1x4x32xf32>
    tpu.vector_store %arg6[%c2_131, %c0_132, %c128_133], %266 {strides = array<i32>} : memref<4x8x256xf32, #tpu.memory_space<vmem>>, vector<1x4x32xf32>,
    %267 = vector.extract_strided_slice %241 {offsets = [0, 1, 32], sizes = [4, 1, 32], strides = [1, 1, 1]} : vector<4x4x128xf32> to vector<4x1x32xf32>
    %268 = vector.shape_cast %267 : vector<4x1x32xf32> to vector<4x32xf32>
    %c2_134 = arith.constant 2 : index
    %c0_135 = arith.constant 0 : index
    %c160_136 = arith.constant 160 : index
    %269 = vector.load %arg6[%c2_134, %c0_135, %c160_136] : memref<4x8x256xf32, #tpu.memory_space<vmem>>, vector<1x4x32xf32>
    %270 = vector.shape_cast %269 : vector<1x4x32xf32> to vector<4x32xf32>
    %271 = vector.shape_cast %268 : vector<4x32xf32> to vector<1x4x32xf32>
    tpu.vector_store %arg6[%c2_134, %c0_135, %c160_136], %271 {strides = array<i32>} : memref<4x8x256xf32, #tpu.memory_space<vmem>>, vector<1x4x32xf32>,
    %272 = vector.extract_strided_slice %241 {offsets = [0, 2, 32], sizes = [4, 1, 32], strides = [1, 1, 1]} : vector<4x4x128xf32> to vector<4x1x32xf32>
    %273 = vector.shape_cast %272 : vector<4x1x32xf32> to vector<4x32xf32>
    %c2_137 = arith.constant 2 : index
    %c0_138 = arith.constant 0 : index
    %c192_139 = arith.constant 192 : index
    %274 = vector.load %arg6[%c2_137, %c0_138, %c192_139] : memref<4x8x256xf32, #tpu.memory_space<vmem>>, vector<1x4x32xf32>
    %275 = vector.shape_cast %274 : vector<1x4x32xf32> to vector<4x32xf32>
    %276 = vector.shape_cast %273 : vector<4x32xf32> to vector<1x4x32xf32>
    tpu.vector_store %arg6[%c2_137, %c0_138, %c192_139], %276 {strides = array<i32>} : memref<4x8x256xf32, #tpu.memory_space<vmem>>, vector<1x4x32xf32>,
    %277 = vector.extract_strided_slice %241 {offsets = [0, 3, 32], sizes = [4, 1, 32], strides = [1, 1, 1]} : vector<4x4x128xf32> to vector<4x1x32xf32>
    %278 = vector.shape_cast %277 : vector<4x1x32xf32> to vector<4x32xf32>
    %c2_140 = arith.constant 2 : index
    %c0_141 = arith.constant 0 : index
    %c224_142 = arith.constant 224 : index
    %279 = vector.load %arg6[%c2_140, %c0_141, %c224_142] : memref<4x8x256xf32, #tpu.memory_space<vmem>>, vector<1x4x32xf32>
    %280 = vector.shape_cast %279 : vector<1x4x32xf32> to vector<4x32xf32>
    %281 = vector.shape_cast %278 : vector<4x32xf32> to vector<1x4x32xf32>
    tpu.vector_store %arg6[%c2_140, %c0_141, %c224_142], %281 {strides = array<i32>} : memref<4x8x256xf32, #tpu.memory_space<vmem>>, vector<1x4x32xf32>,
    %282 = vector.extract_strided_slice %241 {offsets = [0, 0, 64], sizes = [4, 1, 32], strides = [1, 1, 1]} : vector<4x4x128xf32> to vector<4x1x32xf32>
    %283 = vector.shape_cast %282 : vector<4x1x32xf32> to vector<4x32xf32>
    %c2_143 = arith.constant 2 : index
    %c4_144 = arith.constant 4 : index
    %c0_145 = arith.constant 0 : index
    %284 = vector.load %arg6[%c2_143, %c4_144, %c0_145] : memref<4x8x256xf32, #tpu.memory_space<vmem>>, vector<1x4x32xf32>
    %285 = vector.shape_cast %284 : vector<1x4x32xf32> to vector<4x32xf32>
    %286 = vector.shape_cast %283 : vector<4x32xf32> to vector<1x4x32xf32>
    tpu.vector_store %arg6[%c2_143, %c4_144, %c0_145], %286 {strides = array<i32>} : memref<4x8x256xf32, #tpu.memory_space<vmem>>, vector<1x4x32xf32>,
    %287 = vector.extract_strided_slice %241 {offsets = [0, 1, 64], sizes = [4, 1, 32], strides = [1, 1, 1]} : vector<4x4x128xf32> to vector<4x1x32xf32>
    %288 = vector.shape_cast %287 : vector<4x1x32xf32> to vector<4x32xf32>
    %c2_146 = arith.constant 2 : index
    %c4_147 = arith.constant 4 : index
    %c32_148 = arith.constant 32 : index
    %289 = vector.load %arg6[%c2_146, %c4_147, %c32_148] : memref<4x8x256xf32, #tpu.memory_space<vmem>>, vector<1x4x32xf32>
    %290 = vector.shape_cast %289 : vector<1x4x32xf32> to vector<4x32xf32>
    %291 = vector.shape_cast %288 : vector<4x32xf32> to vector<1x4x32xf32>
    tpu.vector_store %arg6[%c2_146, %c4_147, %c32_148], %291 {strides = array<i32>} : memref<4x8x256xf32, #tpu.memory_space<vmem>>, vector<1x4x32xf32>,
    %292 = vector.extract_strided_slice %241 {offsets = [0, 2, 64], sizes = [4, 1, 32], strides = [1, 1, 1]} : vector<4x4x128xf32> to vector<4x1x32xf32>
    %293 = vector.shape_cast %292 : vector<4x1x32xf32> to vector<4x32xf32>
    %c2_149 = arith.constant 2 : index
    %c4_150 = arith.constant 4 : index
    %c64_151 = arith.constant 64 : index
    %294 = vector.load %arg6[%c2_149, %c4_150, %c64_151] : memref<4x8x256xf32, #tpu.memory_space<vmem>>, vector<1x4x32xf32>
    %295 = vector.shape_cast %294 : vector<1x4x32xf32> to vector<4x32xf32>
    %296 = vector.shape_cast %293 : vector<4x32xf32> to vector<1x4x32xf32>
    tpu.vector_store %arg6[%c2_149, %c4_150, %c64_151], %296 {strides = array<i32>} : memref<4x8x256xf32, #tpu.memory_space<vmem>>, vector<1x4x32xf32>,
    %297 = vector.extract_strided_slice %241 {offsets = [0, 3, 64], sizes = [4, 1, 32], strides = [1, 1, 1]} : vector<4x4x128xf32> to vector<4x1x32xf32>
    %298 = vector.shape_cast %297 : vector<4x1x32xf32> to vector<4x32xf32>
    %c2_152 = arith.constant 2 : index
    %c4_153 = arith.constant 4 : index
    %c96_154 = arith.constant 96 : index
    %299 = vector.load %arg6[%c2_152, %c4_153, %c96_154] : memref<4x8x256xf32, #tpu.memory_space<vmem>>, vector<1x4x32xf32>
    %300 = vector.shape_cast %299 : vector<1x4x32xf32> to vector<4x32xf32>
    %301 = vector.shape_cast %298 : vector<4x32xf32> to vector<1x4x32xf32>
    tpu.vector_store %arg6[%c2_152, %c4_153, %c96_154], %301 {strides = array<i32>} : memref<4x8x256xf32, #tpu.memory_space<vmem>>, vector<1x4x32xf32>,
    %302 = vector.extract_strided_slice %241 {offsets = [0, 0, 96], sizes = [4, 1, 32], strides = [1, 1, 1]} : vector<4x4x128xf32> to vector<4x1x32xf32>
    %303 = vector.shape_cast %302 : vector<4x1x32xf32> to vector<4x32xf32>
    %c2_155 = arith.constant 2 : index
    %c4_156 = arith.constant 4 : index
    %c128_157 = arith.constant 128 : index
    %304 = vector.load %arg6[%c2_155, %c4_156, %c128_157] : memref<4x8x256xf32, #tpu.memory_space<vmem>>, vector<1x4x32xf32>
    %305 = vector.shape_cast %304 : vector<1x4x32xf32> to vector<4x32xf32>
    %306 = vector.shape_cast %303 : vector<4x32xf32> to vector<1x4x32xf32>
    tpu.vector_store %arg6[%c2_155, %c4_156, %c128_157], %306 {strides = array<i32>} : memref<4x8x256xf32, #tpu.memory_space<vmem>>, vector<1x4x32xf32>,
    %307 = vector.extract_strided_slice %241 {offsets = [0, 1, 96], sizes = [4, 1, 32], strides = [1, 1, 1]} : vector<4x4x128xf32> to vector<4x1x32xf32>
    %308 = vector.shape_cast %307 : vector<4x1x32xf32> to vector<4x32xf32>
    %c2_158 = arith.constant 2 : index
    %c4_159 = arith.constant 4 : index
    %c160_160 = arith.constant 160 : index
    %309 = vector.load %arg6[%c2_158, %c4_159, %c160_160] : memref<4x8x256xf32, #tpu.memory_space<vmem>>, vector<1x4x32xf32>
    %310 = vector.shape_cast %309 : vector<1x4x32xf32> to vector<4x32xf32>
    %311 = vector.shape_cast %308 : vector<4x32xf32> to vector<1x4x32xf32>
    tpu.vector_store %arg6[%c2_158, %c4_159, %c160_160], %311 {strides = array<i32>} : memref<4x8x256xf32, #tpu.memory_space<vmem>>, vector<1x4x32xf32>,
    %312 = vector.extract_strided_slice %241 {offsets = [0, 2, 96], sizes = [4, 1, 32], strides = [1, 1, 1]} : vector<4x4x128xf32> to vector<4x1x32xf32>
    %313 = vector.shape_cast %312 : vector<4x1x32xf32> to vector<4x32xf32>
    %c2_161 = arith.constant 2 : index
    %c4_162 = arith.constant 4 : index
    %c192_163 = arith.constant 192 : index
    %314 = vector.load %arg6[%c2_161, %c4_162, %c192_163] : memref<4x8x256xf32, #tpu.memory_space<vmem>>, vector<1x4x32xf32>
    %315 = vector.shape_cast %314 : vector<1x4x32xf32> to vector<4x32xf32>
    %316 = vector.shape_cast %313 : vector<4x32xf32> to vector<1x4x32xf32>
    tpu.vector_store %arg6[%c2_161, %c4_162, %c192_163], %316 {strides = array<i32>} : memref<4x8x256xf32, #tpu.memory_space<vmem>>, vector<1x4x32xf32>,
    %317 = vector.extract_strided_slice %241 {offsets = [0, 3, 96], sizes = [4, 1, 32], strides = [1, 1, 1]} : vector<4x4x128xf32> to vector<4x1x32xf32>
    %318 = vector.shape_cast %317 : vector<4x1x32xf32> to vector<4x32xf32>
    %c2_164 = arith.constant 2 : index
    %c4_165 = arith.constant 4 : index
    %c224_166 = arith.constant 224 : index
    %319 = vector.load %arg6[%c2_164, %c4_165, %c224_166] : memref<4x8x256xf32, #tpu.memory_space<vmem>>, vector<1x4x32xf32>
    %320 = vector.shape_cast %319 : vector<1x4x32xf32> to vector<4x32xf32>
    %321 = vector.shape_cast %318 : vector<4x32xf32> to vector<1x4x32xf32>
    tpu.vector_store %arg6[%c2_164, %c4_165, %c224_166], %321 {strides = array<i32>} : memref<4x8x256xf32, #tpu.memory_space<vmem>>, vector<1x4x32xf32>,
    %c3 = arith.constant 3 : index
    %c0_167 = arith.constant 0 : index
    %c0_168 = arith.constant 0 : index
    %322 = vector.load %arg1[%c3, %c0_167, %c0_168] : memref<4x16x32xf32, #tpu.memory_space<vmem>>, vector<1x16x32xf32>
    %323 = vector.shape_cast %322 : vector<1x16x32xf32> to vector<16x32xf32>
    %cst_169 = arith.constant dense<0.000000e+00> : vector<16xf32>
    %324 = vector.multi_reduction <add>, %323, %cst_169 [1] : vector<16x32xf32> to vector<16xf32>
    %325 = vector.shape_cast %324 : vector<16xf32> to vector<16x1xf32>
    %cst_170 = arith.constant 3.200000e+01 : f32
    %326 = vector.broadcast %cst_170 : f32 to vector<16x1xf32>
    %327 = arith.divf %325, %326 : vector<16x1xf32>
    %328 = vector.broadcast %327 : vector<16x1xf32> to vector<16x32xf32>
    %329 = arith.subf %323, %328 : vector<16x32xf32>
    %330 = arith.mulf %329, %329 : vector<16x32xf32>
    %cst_171 = arith.constant dense<0.000000e+00> : vector<16xf32>
    %331 = vector.multi_reduction <add>, %330, %cst_171 [1] : vector<16x32xf32> to vector<16xf32>
    %332 = vector.shape_cast %331 : vector<16xf32> to vector<16x1xf32>
    %cst_172 = arith.constant 3.200000e+01 : f32
    %333 = vector.broadcast %cst_172 : f32 to vector<16x1xf32>
    %334 = arith.divf %332, %333 : vector<16x1xf32>
    %cst_173 = arith.constant 9.99999974E-6 : f32
    %335 = vector.broadcast %cst_173 : f32 to vector<16x1xf32>
    %336 = arith.addf %334, %335 : vector<16x1xf32>
    %337 = math.rsqrt %336 : vector<16x1xf32>
    %338 = vector.broadcast %337 : vector<16x1xf32> to vector<16x32xf32>
    %339 = arith.mulf %329, %338 : vector<16x32xf32>
    %340 = vector.broadcast %0 : vector<1x32xf32> to vector<16x32xf32>
    %341 = arith.mulf %339, %340 : vector<16x32xf32>
    %342 = vector.broadcast %1 : vector<1x32xf32> to vector<16x32xf32>
    %343 = arith.addf %341, %342 : vector<16x32xf32>
    %cst_174 = arith.constant dense<0.000000e+00> : vector<16x128xf32>
    %344 = tpu.matmul %343, %2, %cst_174 {dimension_numbers = #tpu.dot_dimension_numbers<[1], [0], [0], [1], [0, 0, 1, 1], [], []>} : vector<16x32xf32>, vector<32x128xf32>, vector<16x128xf32> -> vector<16x128xf32>
    %345 = vector.broadcast %3 : vector<1x128xf32> to vector<16x128xf32>
    %346 = arith.addf %344, %345 : vector<16x128xf32>
    %347 = vector.shape_cast %346 : vector<16x128xf32> to vector<4x4x128xf32>
    %348 = vector.extract_strided_slice %347 {offsets = [0, 0, 0], sizes = [4, 1, 32], strides = [1, 1, 1]} : vector<4x4x128xf32> to vector<4x1x32xf32>
    %349 = vector.shape_cast %348 : vector<4x1x32xf32> to vector<4x32xf32>
    %c3_175 = arith.constant 3 : index
    %c0_176 = arith.constant 0 : index
    %c0_177 = arith.constant 0 : index
    %350 = vector.load %arg6[%c3_175, %c0_176, %c0_177] : memref<4x8x256xf32, #tpu.memory_space<vmem>>, vector<1x4x32xf32>
    %351 = vector.shape_cast %350 : vector<1x4x32xf32> to vector<4x32xf32>
    %352 = vector.shape_cast %349 : vector<4x32xf32> to vector<1x4x32xf32>
    tpu.vector_store %arg6[%c3_175, %c0_176, %c0_177], %352 {strides = array<i32>} : memref<4x8x256xf32, #tpu.memory_space<vmem>>, vector<1x4x32xf32>,
    %353 = vector.extract_strided_slice %347 {offsets = [0, 1, 0], sizes = [4, 1, 32], strides = [1, 1, 1]} : vector<4x4x128xf32> to vector<4x1x32xf32>
    %354 = vector.shape_cast %353 : vector<4x1x32xf32> to vector<4x32xf32>
    %c3_178 = arith.constant 3 : index
    %c0_179 = arith.constant 0 : index
    %c32_180 = arith.constant 32 : index
    %355 = vector.load %arg6[%c3_178, %c0_179, %c32_180] : memref<4x8x256xf32, #tpu.memory_space<vmem>>, vector<1x4x32xf32>
    %356 = vector.shape_cast %355 : vector<1x4x32xf32> to vector<4x32xf32>
    %357 = vector.shape_cast %354 : vector<4x32xf32> to vector<1x4x32xf32>
    tpu.vector_store %arg6[%c3_178, %c0_179, %c32_180], %357 {strides = array<i32>} : memref<4x8x256xf32, #tpu.memory_space<vmem>>, vector<1x4x32xf32>,
    %358 = vector.extract_strided_slice %347 {offsets = [0, 2, 0], sizes = [4, 1, 32], strides = [1, 1, 1]} : vector<4x4x128xf32> to vector<4x1x32xf32>
    %359 = vector.shape_cast %358 : vector<4x1x32xf32> to vector<4x32xf32>
    %c3_181 = arith.constant 3 : index
    %c0_182 = arith.constant 0 : index
    %c64_183 = arith.constant 64 : index
    %360 = vector.load %arg6[%c3_181, %c0_182, %c64_183] : memref<4x8x256xf32, #tpu.memory_space<vmem>>, vector<1x4x32xf32>
    %361 = vector.shape_cast %360 : vector<1x4x32xf32> to vector<4x32xf32>
    %362 = vector.shape_cast %359 : vector<4x32xf32> to vector<1x4x32xf32>
    tpu.vector_store %arg6[%c3_181, %c0_182, %c64_183], %362 {strides = array<i32>} : memref<4x8x256xf32, #tpu.memory_space<vmem>>, vector<1x4x32xf32>,
    %363 = vector.extract_strided_slice %347 {offsets = [0, 3, 0], sizes = [4, 1, 32], strides = [1, 1, 1]} : vector<4x4x128xf32> to vector<4x1x32xf32>
    %364 = vector.shape_cast %363 : vector<4x1x32xf32> to vector<4x32xf32>
    %c3_184 = arith.constant 3 : index
    %c0_185 = arith.constant 0 : index
    %c96_186 = arith.constant 96 : index
    %365 = vector.load %arg6[%c3_184, %c0_185, %c96_186] : memref<4x8x256xf32, #tpu.memory_space<vmem>>, vector<1x4x32xf32>
    %366 = vector.shape_cast %365 : vector<1x4x32xf32> to vector<4x32xf32>
    %367 = vector.shape_cast %364 : vector<4x32xf32> to vector<1x4x32xf32>
    tpu.vector_store %arg6[%c3_184, %c0_185, %c96_186], %367 {strides = array<i32>} : memref<4x8x256xf32, #tpu.memory_space<vmem>>, vector<1x4x32xf32>,
    %368 = vector.extract_strided_slice %347 {offsets = [0, 0, 32], sizes = [4, 1, 32], strides = [1, 1, 1]} : vector<4x4x128xf32> to vector<4x1x32xf32>
    %369 = vector.shape_cast %368 : vector<4x1x32xf32> to vector<4x32xf32>
    %c3_187 = arith.constant 3 : index
    %c0_188 = arith.constant 0 : index
    %c128_189 = arith.constant 128 : index
    %370 = vector.load %arg6[%c3_187, %c0_188, %c128_189] : memref<4x8x256xf32, #tpu.memory_space<vmem>>, vector<1x4x32xf32>
    %371 = vector.shape_cast %370 : vector<1x4x32xf32> to vector<4x32xf32>
    %372 = vector.shape_cast %369 : vector<4x32xf32> to vector<1x4x32xf32>
    tpu.vector_store %arg6[%c3_187, %c0_188, %c128_189], %372 {strides = array<i32>} : memref<4x8x256xf32, #tpu.memory_space<vmem>>, vector<1x4x32xf32>,
    %373 = vector.extract_strided_slice %347 {offsets = [0, 1, 32], sizes = [4, 1, 32], strides = [1, 1, 1]} : vector<4x4x128xf32> to vector<4x1x32xf32>
    %374 = vector.shape_cast %373 : vector<4x1x32xf32> to vector<4x32xf32>
    %c3_190 = arith.constant 3 : index
    %c0_191 = arith.constant 0 : index
    %c160_192 = arith.constant 160 : index
    %375 = vector.load %arg6[%c3_190, %c0_191, %c160_192] : memref<4x8x256xf32, #tpu.memory_space<vmem>>, vector<1x4x32xf32>
    %376 = vector.shape_cast %375 : vector<1x4x32xf32> to vector<4x32xf32>
    %377 = vector.shape_cast %374 : vector<4x32xf32> to vector<1x4x32xf32>
    tpu.vector_store %arg6[%c3_190, %c0_191, %c160_192], %377 {strides = array<i32>} : memref<4x8x256xf32, #tpu.memory_space<vmem>>, vector<1x4x32xf32>,
    %378 = vector.extract_strided_slice %347 {offsets = [0, 2, 32], sizes = [4, 1, 32], strides = [1, 1, 1]} : vector<4x4x128xf32> to vector<4x1x32xf32>
    %379 = vector.shape_cast %378 : vector<4x1x32xf32> to vector<4x32xf32>
    %c3_193 = arith.constant 3 : index
    %c0_194 = arith.constant 0 : index
    %c192_195 = arith.constant 192 : index
    %380 = vector.load %arg6[%c3_193, %c0_194, %c192_195] : memref<4x8x256xf32, #tpu.memory_space<vmem>>, vector<1x4x32xf32>
    %381 = vector.shape_cast %380 : vector<1x4x32xf32> to vector<4x32xf32>
    %382 = vector.shape_cast %379 : vector<4x32xf32> to vector<1x4x32xf32>
    tpu.vector_store %arg6[%c3_193, %c0_194, %c192_195], %382 {strides = array<i32>} : memref<4x8x256xf32, #tpu.memory_space<vmem>>, vector<1x4x32xf32>,
    %383 = vector.extract_strided_slice %347 {offsets = [0, 3, 32], sizes = [4, 1, 32], strides = [1, 1, 1]} : vector<4x4x128xf32> to vector<4x1x32xf32>
    %384 = vector.shape_cast %383 : vector<4x1x32xf32> to vector<4x32xf32>
    %c3_196 = arith.constant 3 : index
    %c0_197 = arith.constant 0 : index
    %c224_198 = arith.constant 224 : index
    %385 = vector.load %arg6[%c3_196, %c0_197, %c224_198] : memref<4x8x256xf32, #tpu.memory_space<vmem>>, vector<1x4x32xf32>
    %386 = vector.shape_cast %385 : vector<1x4x32xf32> to vector<4x32xf32>
    %387 = vector.shape_cast %384 : vector<4x32xf32> to vector<1x4x32xf32>
    tpu.vector_store %arg6[%c3_196, %c0_197, %c224_198], %387 {strides = array<i32>} : memref<4x8x256xf32, #tpu.memory_space<vmem>>, vector<1x4x32xf32>,
    %388 = vector.extract_strided_slice %347 {offsets = [0, 0, 64], sizes = [4, 1, 32], strides = [1, 1, 1]} : vector<4x4x128xf32> to vector<4x1x32xf32>
    %389 = vector.shape_cast %388 : vector<4x1x32xf32> to vector<4x32xf32>
    %c3_199 = arith.constant 3 : index
    %c4_200 = arith.constant 4 : index
    %c0_201 = arith.constant 0 : index
    %390 = vector.load %arg6[%c3_199, %c4_200, %c0_201] : memref<4x8x256xf32, #tpu.memory_space<vmem>>, vector<1x4x32xf32>
    %391 = vector.shape_cast %390 : vector<1x4x32xf32> to vector<4x32xf32>
    %392 = vector.shape_cast %389 : vector<4x32xf32> to vector<1x4x32xf32>
    tpu.vector_store %arg6[%c3_199, %c4_200, %c0_201], %392 {strides = array<i32>} : memref<4x8x256xf32, #tpu.memory_space<vmem>>, vector<1x4x32xf32>,
    %393 = vector.extract_strided_slice %347 {offsets = [0, 1, 64], sizes = [4, 1, 32], strides = [1, 1, 1]} : vector<4x4x128xf32> to vector<4x1x32xf32>
    %394 = vector.shape_cast %393 : vector<4x1x32xf32> to vector<4x32xf32>
    %c3_202 = arith.constant 3 : index
    %c4_203 = arith.constant 4 : index
    %c32_204 = arith.constant 32 : index
    %395 = vector.load %arg6[%c3_202, %c4_203, %c32_204] : memref<4x8x256xf32, #tpu.memory_space<vmem>>, vector<1x4x32xf32>
    %396 = vector.shape_cast %395 : vector<1x4x32xf32> to vector<4x32xf32>
    %397 = vector.shape_cast %394 : vector<4x32xf32> to vector<1x4x32xf32>
    tpu.vector_store %arg6[%c3_202, %c4_203, %c32_204], %397 {strides = array<i32>} : memref<4x8x256xf32, #tpu.memory_space<vmem>>, vector<1x4x32xf32>,
    %398 = vector.extract_strided_slice %347 {offsets = [0, 2, 64], sizes = [4, 1, 32], strides = [1, 1, 1]} : vector<4x4x128xf32> to vector<4x1x32xf32>
    %399 = vector.shape_cast %398 : vector<4x1x32xf32> to vector<4x32xf32>
    %c3_205 = arith.constant 3 : index
    %c4_206 = arith.constant 4 : index
    %c64_207 = arith.constant 64 : index
    %400 = vector.load %arg6[%c3_205, %c4_206, %c64_207] : memref<4x8x256xf32, #tpu.memory_space<vmem>>, vector<1x4x32xf32>
    %401 = vector.shape_cast %400 : vector<1x4x32xf32> to vector<4x32xf32>
    %402 = vector.shape_cast %399 : vector<4x32xf32> to vector<1x4x32xf32>
    tpu.vector_store %arg6[%c3_205, %c4_206, %c64_207], %402 {strides = array<i32>} : memref<4x8x256xf32, #tpu.memory_space<vmem>>, vector<1x4x32xf32>,
    %403 = vector.extract_strided_slice %347 {offsets = [0, 3, 64], sizes = [4, 1, 32], strides = [1, 1, 1]} : vector<4x4x128xf32> to vector<4x1x32xf32>
    %404 = vector.shape_cast %403 : vector<4x1x32xf32> to vector<4x32xf32>
    %c3_208 = arith.constant 3 : index
    %c4_209 = arith.constant 4 : index
    %c96_210 = arith.constant 96 : index
    %405 = vector.load %arg6[%c3_208, %c4_209, %c96_210] : memref<4x8x256xf32, #tpu.memory_space<vmem>>, vector<1x4x32xf32>
    %406 = vector.shape_cast %405 : vector<1x4x32xf32> to vector<4x32xf32>
    %407 = vector.shape_cast %404 : vector<4x32xf32> to vector<1x4x32xf32>
    tpu.vector_store %arg6[%c3_208, %c4_209, %c96_210], %407 {strides = array<i32>} : memref<4x8x256xf32, #tpu.memory_space<vmem>>, vector<1x4x32xf32>,
    %408 = vector.extract_strided_slice %347 {offsets = [0, 0, 96], sizes = [4, 1, 32], strides = [1, 1, 1]} : vector<4x4x128xf32> to vector<4x1x32xf32>
    %409 = vector.shape_cast %408 : vector<4x1x32xf32> to vector<4x32xf32>
    %c3_211 = arith.constant 3 : index
    %c4_212 = arith.constant 4 : index
    %c128_213 = arith.constant 128 : index
    %410 = vector.load %arg6[%c3_211, %c4_212, %c128_213] : memref<4x8x256xf32, #tpu.memory_space<vmem>>, vector<1x4x32xf32>
    %411 = vector.shape_cast %410 : vector<1x4x32xf32> to vector<4x32xf32>
    %412 = vector.shape_cast %409 : vector<4x32xf32> to vector<1x4x32xf32>
    tpu.vector_store %arg6[%c3_211, %c4_212, %c128_213], %412 {strides = array<i32>} : memref<4x8x256xf32, #tpu.memory_space<vmem>>, vector<1x4x32xf32>,
    %413 = vector.extract_strided_slice %347 {offsets = [0, 1, 96], sizes = [4, 1, 32], strides = [1, 1, 1]} : vector<4x4x128xf32> to vector<4x1x32xf32>
    %414 = vector.shape_cast %413 : vector<4x1x32xf32> to vector<4x32xf32>
    %c3_214 = arith.constant 3 : index
    %c4_215 = arith.constant 4 : index
    %c160_216 = arith.constant 160 : index
    %415 = vector.load %arg6[%c3_214, %c4_215, %c160_216] : memref<4x8x256xf32, #tpu.memory_space<vmem>>, vector<1x4x32xf32>
    %416 = vector.shape_cast %415 : vector<1x4x32xf32> to vector<4x32xf32>
    %417 = vector.shape_cast %414 : vector<4x32xf32> to vector<1x4x32xf32>
    tpu.vector_store %arg6[%c3_214, %c4_215, %c160_216], %417 {strides = array<i32>} : memref<4x8x256xf32, #tpu.memory_space<vmem>>, vector<1x4x32xf32>,
    %418 = vector.extract_strided_slice %347 {offsets = [0, 2, 96], sizes = [4, 1, 32], strides = [1, 1, 1]} : vector<4x4x128xf32> to vector<4x1x32xf32>
    %419 = vector.shape_cast %418 : vector<4x1x32xf32> to vector<4x32xf32>
    %c3_217 = arith.constant 3 : index
    %c4_218 = arith.constant 4 : index
    %c192_219 = arith.constant 192 : index
    %420 = vector.load %arg6[%c3_217, %c4_218, %c192_219] : memref<4x8x256xf32, #tpu.memory_space<vmem>>, vector<1x4x32xf32>
    %421 = vector.shape_cast %420 : vector<1x4x32xf32> to vector<4x32xf32>
    %422 = vector.shape_cast %419 : vector<4x32xf32> to vector<1x4x32xf32>
    tpu.vector_store %arg6[%c3_217, %c4_218, %c192_219], %422 {strides = array<i32>} : memref<4x8x256xf32, #tpu.memory_space<vmem>>, vector<1x4x32xf32>,
    %423 = vector.extract_strided_slice %347 {offsets = [0, 3, 96], sizes = [4, 1, 32], strides = [1, 1, 1]} : vector<4x4x128xf32> to vector<4x1x32xf32>
    %424 = vector.shape_cast %423 : vector<4x1x32xf32> to vector<4x32xf32>
    %c3_220 = arith.constant 3 : index
    %c4_221 = arith.constant 4 : index
    %c224_222 = arith.constant 224 : index
    %425 = vector.load %arg6[%c3_220, %c4_221, %c224_222] : memref<4x8x256xf32, #tpu.memory_space<vmem>>, vector<1x4x32xf32>
    %426 = vector.shape_cast %425 : vector<1x4x32xf32> to vector<4x32xf32>
    %427 = vector.shape_cast %424 : vector<4x32xf32> to vector<1x4x32xf32>
    tpu.vector_store %arg6[%c3_220, %c4_221, %c224_222], %427 {strides = array<i32>} : memref<4x8x256xf32, #tpu.memory_space<vmem>>, vector<1x4x32xf32>,
    return
  }
  func.func @transform_0(%arg0: i32) -> (i32, i32, i32) {
    %c0_i32 = arith.constant 0 : i32
    %c0_i32_0 = arith.constant 0 : i32
    %c0_i32_1 = arith.constant 0 : i32
    return %arg0, %c0_i32, %c0_i32_0 : i32, i32, i32
  }
  func.func @transform_1(%arg0: i32) -> (i32, i32) {
    %c0_i32 = arith.constant 0 : i32
    %c0_i32_0 = arith.constant 0 : i32
    %c0_i32_1 = arith.constant 0 : i32
    return %c0_i32, %c0_i32_0 : i32, i32
  }
  func.func @transform_2(%arg0: i32) -> (i32, i32) {
    %c0_i32 = arith.constant 0 : i32
    %c0_i32_0 = arith.constant 0 : i32
    %c0_i32_1 = arith.constant 0 : i32
    return %c0_i32, %c0_i32_0 : i32, i32
  }
  func.func @transform_3(%arg0: i32) -> (i32, i32) {
    %c0_i32 = arith.constant 0 : i32
    %c0_i32_0 = arith.constant 0 : i32
    %c0_i32_1 = arith.constant 0 : i32
    return %c0_i32, %c0_i32_0 : i32, i32
  }
  func.func @transform_4(%arg0: i32) -> (i32, i32) {
    %c0_i32 = arith.constant 0 : i32
    %c0_i32_0 = arith.constant 0 : i32
    %c0_i32_1 = arith.constant 0 : i32
    return %c0_i32, %c0_i32_0 : i32, i32
  }
  func.func @transform_5(%arg0: i32) -> (i32, i32, i32) {
    %c0_i32 = arith.constant 0 : i32
    %c0_i32_0 = arith.constant 0 : i32
    %c0_i32_1 = arith.constant 0 : i32
    return %arg0, %c0_i32, %c0_i32_0 : i32, i32, i32
  }
}

</mosaic_0001>

<llo_original>
// kernel: tile.9
$region0: #{tile.9}
  %s0 = inlined_call_operand.vmem [shape: f32[8,16], index: 0, kind: input, shape index: {}]
  %s1 = inlined_call_operand.vmem [shape: f32[1,128], index: 1, kind: output, shape index: {}]
  $region1: #{tile.9} parent=0
    #allocation0 [shape = 'u8[4096]{0}', space=vmem, size = 0x1000, scoped, tag = 'scoped mem for output reshape']
    %v2 = vld [vmem:[%s0] sm:$0x1]
    %vm3 = vcmask 130048
    %4 = vst.msk [vmem:[#allocation0] sm:$0x1] %vm3, %v2
    %s5 = scalar_lea.vmem %s0, 7
    %v6 = vld [vmem:[%s5] sm:$0x1]
    %7 = vrot.lane.b32.xlu0 %v6, 112
    %v8 = vpop.permute.xlu0 %7
    %vm9 = vcmask 1048448
    %10 = vst.msk [vmem:[#allocation0] sm:$0x1] %vm9, %v8
    %s11 = scalar_lea.vmem %s0, 6
    %v12 = vld [vmem:[%s11] sm:$0x1]
    %13 = vrot.lane.b32.xlu0 %v12, 96
    %v14 = vpop.permute.xlu0 %13
    %vm15 = vcmask 917248
    %16 = vst.msk [vmem:[#allocation0] sm:$0x1] %vm15, %v14
    %s17 = scalar_lea.vmem %s0, 5
    %v18 = vld [vmem:[%s17] sm:$0x1]
    %19 = vrot.lane.b32.xlu0 %v18, 80
    %v20 = vpop.permute.xlu0 %19
    %vm21 = vcmask 786048
    %22 = vst.msk [vmem:[#allocation0] sm:$0x1] %vm21, %v20
    %s23 = scalar_lea.vmem %s0, 4
    %v24 = vld [vmem:[%s23] sm:$0x1]
    %25 = vrot.lane.b32.xlu0 %v24, 64
    %v26 = vpop.permute.xlu0 %25
    %vm27 = vcmask 654848
    %28 = vst.msk [vmem:[#allocation0] sm:$0x1] %vm27, %v26
    %s29 = scalar_lea.vmem %s0, 3
    %v30 = vld [vmem:[%s29] sm:$0x1]
    %31 = vrot.lane.b32.xlu0 %v30, 48
    %v32 = vpop.permute.xlu0 %31
    %vm33 = vcmask 523648
    %34 = vst.msk [vmem:[#allocation0] sm:$0x1] %vm33, %v32
    %s35 = scalar_lea.vmem %s0, 2
    %v36 = vld [vmem:[%s35] sm:$0x1]
    %37 = vrot.lane.b32.xlu0 %v36, 32
    %v38 = vpop.permute.xlu0 %37
    %vm39 = vcmask 392448
    %40 = vst.msk [vmem:[#allocation0] sm:$0x1] %vm39, %v38
    %s41 = scalar_lea.vmem %s0, 1
    %v42 = vld [vmem:[%s41] sm:$0x1]
    %43 = vrot.lane.b32.xlu0 %v42, 16
    %v44 = vpop.permute.xlu0 %43
    %vm45 = vcmask 261248
    %46 = vst.msk [vmem:[#allocation0] sm:$0x1] %vm45, %v44
    %s48 = ssub.s32 2, 1
    %v49 = vld [vmem:[#allocation0] sm:%s48]
    %s51 = ssub.s32 2, 1
    %52 = vst [vmem:[%s1] sm:%s51] %v49

// kernel: tile.8
$region0: #{tile.8}
  #allocation0 [shape = 's32[1]{0}', space=sflag, size = 0x4, scoped, tag = 'scoped memory for tile.8']
  %s0 = inlined_call_operand.vmem [shape: f32[16], index: 0, kind: input, shape index: {}]
  %s1 = inlined_call_operand.vmem [shape: f32[8,16], index: 1, kind: output, shape index: {}]
  // Predicated region
  $region2: #{tile.8} parent=0 // pred_check
    _
  $region3: #{tile.8} parent=0 // pred_check_branch
    %3 = sbr.rel (0) target = $region5
  $region4: #{tile.8} parent=0 // pred_region
    _
  $region5: #{tile.8} parent=0 // pred_fallthru
    _
  %v4 = vld [vmem:[%s0] ss:$0 sm:$0xff]
  %5 = vst [vmem:[%s1] sm:$0xff] %v4

// kernel: patch_expanding_pallas.1
$region0: #{patch_expanding_pallas.1}
  #allocation0 [shape = 'u32[]', space=smem, size = 0x4, offset = 0x4, fixed_abs, tag = 'smem constant byte address 0x4 - core index']
  #allocation1 [shape = 'u32[72,128]{1,0:T(1,128)}', space=vmem, size = 0x9000, scoped, tag = 'internal scratch']
  %s0 = inlined_call_operand.vmem [shape: f32[8,16,32], index: 0, kind: input, shape index: {}]
  %s1 = inlined_call_operand.vmem [shape: f32[1,32], index: 1, kind: input, shape index: {}]
  %s2 = inlined_call_operand.vmem [shape: f32[1,32], index: 2, kind: input, shape index: {}]
  %s3 = inlined_call_operand.vmem [shape: f32[32,128], index: 3, kind: input, shape index: {}]
  %s4 = inlined_call_operand.vmem [shape: f32[1,128], index: 4, kind: input, shape index: {}]
  %s5 = inlined_call_operand.vmem [shape: f32[8,8,256], index: 5, kind: output, shape index: {}]
  %s6 = sld [smem:[#allocation0]]
  $region53: #{patch_expanding_pallas.1} parent=0
    _
  %s8 = ssub.s32 1, %s6
  %s9 = scalar_select 0, %s8, %s6
  loop: start=0, step=1, limit=4
  $region2: #{patch_expanding_pallas.1} parent=0 // loop_pre_header
    _
  $region3: #{patch_expanding_pallas.1} parent=0 // loop_header
    %s11 = sphi 0, %s15
    %p12 = scmp.ge.s32.totalorder %s11, 4
    %s21 = sphi 0, %s23
    %s24 = sphi 0, %s21
    %s25 = sphi 0, %s24
    %s41 = sphi 0, %s25
    %s45 = sphi 0, %s45
    %s47 = sphi 0, %s45
    %s48 = sphi 0, %s47
    %s62 = sphi 0, %s48
    %s66 = sphi 0, %s66
    %s68 = sphi 0, %s66
    %s69 = sphi 0, %s68
    %s83 = sphi 0, %s69
    %s87 = sphi 0, %s87
    %s89 = sphi 0, %s87
    %s90 = sphi 0, %s89
    %s104 = sphi 0, %s90
    %s108 = sphi 0, %s108
    %s110 = sphi 0, %s108
    %s111 = sphi 0, %s110
    %s125 = sphi 0, %s111
    %s131 = sphi 0, %s133
    %s134 = sphi 0, %s131
    %s135 = sphi 0, %s134
    %s151 = sphi 0, %s135
  $region4: #{patch_expanding_pallas.1} parent=0 // loop_header_branch
    %14 = sbr.rel (%p12) target = $region8
  $region5: #{patch_expanding_pallas.1} parent=0 // loop_body
    %s16 = ssub.s32 %s11, 1
    %s17 = ssub.s32 %s11, 2
    %s18 = sadd.s32 %s11, 1
    %s19 = ssub.s32 %s11, %s18
    %p20 = scmp.eq.s32.totalorder %s19, 0
    %s22 = sadd.s32 %s21, 1
    %s23 = scalar_select %p20, %s21, %s22
    %p26 = pneg %p20
    %p27 = scmp.eq.s32.totalorder %s11, 1
    %p28 = por %p26, %p27
    %p29 = scmp.ne.s32.totalorder %s21, %s24
    %p30 = scmp.eq.s32.totalorder %s11, 0
    %p31 = por %p29, %p30
    %p32 = scmp.ne.s32.totalorder %s21, %s24
    %p33 = scmp.eq.s32.totalorder %s16, 1
    %p34 = por %p32, %p33
    %p35 = scmp.ne.s32.totalorder %s24, %s25
    %p36 = scmp.eq.s32.totalorder %s16, 0
    %p37 = por %p35, %p36
    %p38 = scmp.ne.s32.totalorder %s24, %s25
    %p39 = scmp.eq.s32.totalorder %s17, 1
    %p40 = por %p38, %p39
    %p42 = scmp.ne.s32.totalorder %s25, %s41
    %p43 = scmp.eq.s32.totalorder %s17, 0
    %p44 = por %p42, %p43
    %s46 = sadd.s32 %s45, 1
    %p49 = scmp.eq.s32.totalorder %s11, 1
    %p50 = scmp.ne.s32.totalorder %s45, %s47
    %p51 = scmp.eq.s32.totalorder %s11, 0
    %p52 = por %p50, %p51
    %p53 = scmp.ne.s32.totalorder %s45, %s47
    %p54 = scmp.eq.s32.totalorder %s16, 1
    %p55 = por %p53, %p54
    %p56 = scmp.ne.s32.totalorder %s47, %s48
    %p57 = scmp.eq.s32.totalorder %s16, 0
    %p58 = por %p56, %p57
    %p59 = scmp.ne.s32.totalorder %s47, %s48
    %p60 = scmp.eq.s32.totalorder %s17, 1
    %p61 = por %p59, %p60
    %p63 = scmp.ne.s32.totalorder %s48, %s62
    %p64 = scmp.eq.s32.totalorder %s17, 0
    %p65 = por %p63, %p64
    %s67 = sadd.s32 %s66, 1
    %p70 = scmp.eq.s32.totalorder %s11, 1
    %p71 = scmp.ne.s32.totalorder %s66, %s68
    %p72 = scmp.eq.s32.totalorder %s11, 0
    %p73 = por %p71, %p72
    %p74 = scmp.ne.s32.totalorder %s66, %s68
    %p75 = scmp.eq.s32.totalorder %s16, 1
    %p76 = por %p74, %p75
    %p77 = scmp.ne.s32.totalorder %s68, %s69
    %p78 = scmp.eq.s32.totalorder %s16, 0
    %p79 = por %p77, %p78
    %p80 = scmp.ne.s32.totalorder %s68, %s69
    %p81 = scmp.eq.s32.totalorder %s17, 1
    %p82 = por %p80, %p81
    %p84 = scmp.ne.s32.totalorder %s69, %s83
    %p85 = scmp.eq.s32.totalorder %s17, 0
    %p86 = por %p84, %p85
    %s88 = sadd.s32 %s87, 1
    %p91 = scmp.eq.s32.totalorder %s11, 1
    %p92 = scmp.ne.s32.totalorder %s87, %s89
    %p93 = scmp.eq.s32.totalorder %s11, 0
    %p94 = por %p92, %p93
    %p95 = scmp.ne.s32.totalorder %s87, %s89
    %p96 = scmp.eq.s32.totalorder %s16, 1
    %p97 = por %p95, %p96
    %p98 = scmp.ne.s32.totalorder %s89, %s90
    %p99 = scmp.eq.s32.totalorder %s16, 0
    %p100 = por %p98, %p99
    %p101 = scmp.ne.s32.totalorder %s89, %s90
    %p102 = scmp.eq.s32.totalorder %s17, 1
    %p103 = por %p101, %p102
    %p105 = scmp.ne.s32.totalorder %s90, %s104
    %p106 = scmp.eq.s32.totalorder %s17, 0
    %p107 = por %p105, %p106
    %s109 = sadd.s32 %s108, 1
    %p112 = scmp.eq.s32.totalorder %s11, 1
    %p113 = scmp.ne.s32.totalorder %s108, %s110
    %p114 = scmp.eq.s32.totalorder %s11, 0
    %p115 = por %p113, %p114
    %p116 = scmp.ne.s32.totalorder %s108, %s110
    %p117 = scmp.eq.s32.totalorder %s16, 1
    %p118 = por %p116, %p117
    %p119 = scmp.ne.s32.totalorder %s110, %s111
    %p120 = scmp.eq.s32.totalorder %s16, 0
    %p121 = por %p119, %p120
    %p122 = scmp.ne.s32.totalorder %s110, %s111
    %p123 = scmp.eq.s32.totalorder %s17, 1
    %p124 = por %p122, %p123
    %p126 = scmp.ne.s32.totalorder %s111, %s125
    %p127 = scmp.eq.s32.totalorder %s17, 0
    %p128 = por %p126, %p127
    %s129 = ssub.s32 %s11, %s18
    %p130 = scmp.eq.s32.totalorder %s129, 0
    %s132 = sadd.s32 %s131, 1
    %s133 = scalar_select %p130, %s131, %s132
    %p136 = pneg %p130
    %p137 = scmp.eq.s32.totalorder %s11, 1
    %p138 = por %p136, %p137
    %p139 = scmp.ne.s32.totalorder %s131, %s134
    %p140 = scmp.eq.s32.totalorder %s11, 0
    %p141 = por %p139, %p140
    %p142 = scmp.ne.s32.totalorder %s131, %s134
    %p143 = scmp.eq.s32.totalorder %s16, 1
    %p144 = por %p142, %p143
    %p145 = scmp.ne.s32.totalorder %s134, %s135
    %p146 = scmp.eq.s32.totalorder %s16, 0
    %p147 = por %p145, %p146
    %p148 = scmp.ne.s32.totalorder %s134, %s135
    %p149 = scmp.eq.s32.totalorder %s17, 1
    %p150 = por %p148, %p149
    %p152 = scmp.ne.s32.totalorder %s135, %s151
    %p153 = scmp.eq.s32.totalorder %s17, 0
    %p154 = por %p152, %p153
    %p155 = scmp.le.s32.totalorder 1, %s11
    %p156 = scmp.lt.s32.totalorder %s11, 3
    %p157 = pnand %p155, %p156
    %p158 = pneg %p157
    // Predicated region
    $region9: #{patch_expanding_pallas.1} parent=5 // pred_check
      _
    $region10: #{patch_expanding_pallas.1} parent=5 // pred_check_branch
      %160 = sbr.rel (%p157) target = $region12
    $region11: #{patch_expanding_pallas.1} parent=5 // pred_region
      %s161 = ssub.s32 %s11, 1
      // Predicated region
      $region13: #{patch_expanding_pallas.1} parent=11 // pred_check
        %p162 = pneg %p58
      $region14: #{patch_expanding_pallas.1} parent=11 // pred_check_branch
        %164 = sbr.rel (%p162) target = $region16
      $region15: #{patch_expanding_pallas.1} parent=11 // pred_region
        _
      $region16: #{patch_expanding_pallas.1} parent=11 // pred_fallthru
        _
      // Predicated region
      $region17: #{patch_expanding_pallas.1} parent=11 // pred_check
        %p165 = pneg %p79
      $region18: #{patch_expanding_pallas.1} parent=11 // pred_check_branch
        %167 = sbr.rel (%p165) target = $region20
      $region19: #{patch_expanding_pallas.1} parent=11 // pred_region
        _
      $region20: #{patch_expanding_pallas.1} parent=11 // pred_fallthru
        _
      // Predicated region
      $region21: #{patch_expanding_pallas.1} parent=11 // pred_check
        %p168 = pneg %p100
      $region22: #{patch_expanding_pallas.1} parent=11 // pred_check_branch
        %170 = sbr.rel (%p168) target = $region24
      $region23: #{patch_expanding_pallas.1} parent=11 // pred_region
        _
      $region24: #{patch_expanding_pallas.1} parent=11 // pred_fallthru
        _
      // Predicated region
      $region25: #{patch_expanding_pallas.1} parent=11 // pred_check
        %p171 = pneg %p121
      $region26: #{patch_expanding_pallas.1} parent=11 // pred_check_branch
        %173 = sbr.rel (%p171) target = $region28
      $region27: #{patch_expanding_pallas.1} parent=11 // pred_region
        _
      $region28: #{patch_expanding_pallas.1} parent=11 // pred_fallthru
        _
    $region12: #{patch_expanding_pallas.1} parent=5 // pred_fallthru
      _
    %p174 = scmp.lt.s32.totalorder %s11, 2
    // Predicated region
    $region29: #{patch_expanding_pallas.1} parent=5 // pred_check
      %p175 = pneg %p174
    $region30: #{patch_expanding_pallas.1} parent=5 // pred_check_branch
      %177 = sbr.rel (%p175) target = $region32
    $region31: #{patch_expanding_pallas.1} parent=5 // pred_region
      // Predicated region
      $region33: #{patch_expanding_pallas.1} parent=31 // pred_check
        %p178 = pneg %p31
      $region34: #{patch_expanding_pallas.1} parent=31 // pred_check_branch
        %180 = sbr.rel (%p178) target = $region36
      $region35: #{patch_expanding_pallas.1} parent=31 // pred_region
        %s181 = smul.u32 4, %s11
        %p182 = scmp.lt.s32.totalorder %s181, 7
        %s183 = scalar_select %p182, %s181, 7
        %s184 = smul.addr %s183, 2
        %s185 = smul.addr %s184, 8
        %s186 = scalar_lea.vmem %s0, %s185
        %s187 = smul.u32 4, %s11
      $region36: #{patch_expanding_pallas.1} parent=31 // pred_fallthru
        _
    $region32: #{patch_expanding_pallas.1} parent=5 // pred_fallthru
      _
    %p188 = scmp.le.s32.totalorder 1, %s11
    %p189 = scmp.lt.s32.totalorder %s11, 3
    %p190 = pnand %p188, %p189
    %p191 = pneg %p190
    // Predicated region
    $region37: #{patch_expanding_pallas.1} parent=5 // pred_check
      _
    $region38: #{patch_expanding_pallas.1} parent=5 // pred_check_branch
      %193 = sbr.rel (%p190) target = $region40
    $region39: #{patch_expanding_pallas.1} parent=5 // pred_region
      %s194 = ssub.s32 %s11, 1
      %s195 = smul.u32 4, %s16
      %p196 = scmp.lt.s32.totalorder %s195, 7
      %s197 = scalar_select %p196, %s195, 7
      %s198 = smul.addr %s197, 2
      %s199 = smul.addr %s198, 8
      %s200 = scalar_lea.vmem %s0, %s199
      %p201 = pneg %p37
      %p202 = pneg %p34
      %p203 = pneg %p58
      %p204 = pneg %p55
      %p205 = pneg %p79
      %p206 = pneg %p76
      %p207 = pneg %p100
      %p208 = pneg %p97
      %p209 = pneg %p121
      %p210 = pneg %p118
      %p211 = pneg %p147
      %p212 = pneg %p144
      %s213 = smul.u32 4, %s16
      %p214 = scmp.lt.s32.totalorder %s213, 7
      %s215 = scalar_select %p214, %s213, 7
      %s216 = smul.addr %s215, 2
      %s217 = smul.addr %s216, 8
      %s218 = scalar_lea.vmem %s5, %s217
      %s219 = smul.u32 4, %s16
      %p220 = scmp.lt.s32.totalorder %s219, 7
      %s221 = scalar_select %p220, %s219, 7
      %s222 = smul.addr %s221, 2
      %s223 = smul.addr %s222, 8
      %s224 = scalar_lea.vmem %s0, %s223
      %s225 = smul.u32 4, %s16
      %s226 = smul.u32 4, %s16
      %p227 = scmp.lt.s32.totalorder %s226, 7
      %s228 = scalar_select %p227, %s226, 7
      %s229 = smul.addr %s228, 2
      %s230 = smul.addr %s229, 8
      %s231 = scalar_lea.vmem %s5, %s230
      %s232 = smul.u32 4, %s16
      %v233 = vld [vmem:[%s1] sm:$0x1]
      %v234 = vld [vmem:[%s2] sm:$0x1]
      %v235 = vld [vmem:[%s3] sm:$0xff]
      %v236 = vld [vmem:[%s3 + $0x8] sm:$0xff]
      %v237 = vld [vmem:[%s3 + $0x10] sm:$0xff]
      %v238 = vld [vmem:[%s3 + $0x18] sm:$0xff]
      %v239 = vld [vmem:[%s4] sm:$0x1]
      %v240 = vld [vmem:[%s224] sm:$0xff]
      %v241 = vld [vmem:[%s224 + $0x8] sm:$0xff]
      %vm242 = vcmask 261120
      %v243 = vsel %vm242, %v240, 0.0
      %244 = vadd.xlane.f32.xlu0 %v243
      %v245 = vpop.xlane.xlu0 %244
      %v246 = vsel %vm242, %v241, 0.0
      %247 = vadd.xlane.f32.xlu0 %v246
      %v248 = vpop.xlane.xlu0 %247
      %v249 = vrcp.pop 32.0
      %v250 = vmul.f32 32.0, %v249
      %v251 = vsub.f32 1.0, %v250
      %v252 = vmul.f32 %v249, %v251
      %v253 = vadd.f32 %v249, %v252
      %vm254 = vweird.f32 %v249
      %v255 = vsel %vm254, %v249, %v253
      %v256 = vmul.f32 %v245, %v255
      %v257 = vmul.f32 %v248, %v255
      %v258 = vsub.f32 %v240, %v256
      %v259 = vsub.f32 %v241, %v257
      %v260 = vmul.f32 %v258, %v258
      %v261 = vmul.f32 %v259, %v259
      %v262 = vsel %vm242, %v260, 0.0
      %263 = vadd.xlane.f32.xlu0 %v262
      %v264 = vpop.xlane.xlu0 %263
      %v265 = vsel %vm242, %v261, 0.0
      %266 = vadd.xlane.f32.xlu0 %v265
      %v267 = vpop.xlane.xlu0 %266
      %v268 = vmul.f32 %v264, %v255
      %v269 = vmul.f32 %v267, %v255
      %v270 = vadd.f32 %v268, 1e-05
      %v271 = vadd.f32 %v269, 1e-05
      %v272 = vrsqrt.pop %v270
      %v273 = vmul.f32 %v272, %v270
      %v274 = vmul.f32 %v273, %v272
      %v275 = vmul.f32 0.5, %v274
      %v276 = vsub.f32 1.5, %v275
      %v277 = vmul.f32 %v272, %v276
      %vm278 = vweird.f32 %v270
      %vm279 = vweird.f32 %v272
      %vm280 = vmor %vm278, %vm279
      %v281 = vsel %vm280, %v272, %v277
      %v282 = vrsqrt.pop %v271
      %v283 = vmul.f32 %v282, %v271
      %v284 = vmul.f32 %v283, %v282
      %v285 = vmul.f32 0.5, %v284
      %v286 = vsub.f32 1.5, %v285
      %v287 = vmul.f32 %v282, %v286
      %vm288 = vweird.f32 %v271
      %vm289 = vweird.f32 %v282
      %vm290 = vmor %vm288, %vm289
      %v291 = vsel %vm290, %v282, %v287
      %v292 = vmul.f32 %v258, %v281
      %v293 = vmul.f32 %v259, %v291
      %v295 = vperm.slane %v233, 0
      %v297 = vmul.f32 %v292, %v295
      %v298 = vmul.f32 %v293, %v295
      %v300 = vperm.slane %v234, 0
      %v302 = vadd.f32 %v297, %v300
      %v303 = vadd.f32 %v298, %v300
      %v305 = vperm.slane %v239, 0
      %v308 = vsel %vm242, %v302, 0
      %v311 = vsel %vm242, %v303, 0
      %313 = vmatpush.msra.mxu0 0.0
      %314 = vmatpush.msra.mxu0 0.0
      %315 = vmatpush.msra.mxu0 0.0
      %316 = vmatpush.msra.mxu0 0.0
      %317 = vmatpush.msra.mxu0 0.0
      %318 = vmatpush.msra.mxu0 0.0
      %319 = vmatpush.msra.mxu0 0.0
      %320 = vmatpush.msra.mxu0 0.0
      %321 = vmatpush.msra.mxu0 0.0
      %322 = vmatpush.msra.mxu0 0.0
      %323 = vmatpush.msra.mxu0 0.0
      %324 = vmatpush.msra.mxu0 0.0
      %325 = vmatpush.msra.mxu0 %v238
      %326 = vmatpush.msra.mxu0 %v237
      %327 = vmatpush.msra.mxu0 %v236
      %328 = vmatpush.msra.mxu0 %v235
      %329 = vmatmul.f32.gmra.mxu0 %v308
      %v330 = vpop.f32.mrf.mxu0
      %v331 = vadd.f32 %v305, %v330
      %332 = vmatmul.f32.gmra.mxu0 %v311
      %v333 = vpop.f32.mrf.mxu0
      %v334 = vadd.f32 %v305, %v333
      %335 = vdwg.mxu0
      %v338 = vrot.slane %v331, 4
      %v339 = vrot.slane %v334, 4
      %v340 = vperm.slane %v331, 0
      %v341 = vperm.slane %v338, 0
      %v342 = vperm.slane %v334, 0
      %v343 = vperm.slane %v339, 0
      %vm344 = vcmask 1041409
      %v345 = vsel %vm344, %v341, %v340
      %vm346 = vcmask 1042434
      %v347 = vsel %vm346, %v342, %v345
      %vm348 = vcmask 1043459
      %v349 = vsel %vm348, %v343, %v347
      %vm351 = vcmask 257024
      %352 = vst.msk [vmem:[%s231] sm:$0xf] %vm351, %v349
      %v353 = vperm.slane %v331, 1
      %v354 = vperm.slane %v338, 1
      %v355 = vperm.slane %v334, 1
      %v356 = vperm.slane %v339, 1
      %v357 = vsel %vm344, %v354, %v353
      %v358 = vsel %vm346, %v355, %v357
      %v359 = vsel %vm348, %v356, %v358
      %360 = vrot.lane.b32.xlu0 %v359, 32
      %v361 = vpop.permute.xlu0 %360
      %vm363 = vcmask 519424
      %364 = vst.msk [vmem:[%s231] sm:$0xf] %vm363, %v361
      %v365 = vperm.slane %v331, 2
      %v366 = vperm.slane %v338, 2
      %v367 = vperm.slane %v334, 2
      %v368 = vperm.slane %v339, 2
      %v369 = vsel %vm344, %v366, %v365
      %v370 = vsel %vm346, %v367, %v369
      %v371 = vsel %vm348, %v368, %v370
      %372 = vrot.lane.b32.xlu0 %v371, 64
      %v373 = vpop.permute.xlu0 %372
      %vm375 = vcmask 781824
      %376 = vst.msk [vmem:[%s231] sm:$0xf] %vm375, %v373
      %v377 = vperm.slane %v331, 3
      %v378 = vperm.slane %v338, 3
      %v379 = vperm.slane %v334, 3
      %v380 = vperm.slane %v339, 3
      %v381 = vsel %vm344, %v378, %v377
      %v382 = vsel %vm346, %v379, %v381
      %v383 = vsel %vm348, %v380, %v382
      %384 = vrot.lane.b32.xlu0 %v383, 96
      %v385 = vpop.permute.xlu0 %384
      %vm387 = vcmask 1044224
      %388 = vst.msk [vmem:[%s231] sm:$0xf] %vm387, %v385
      %389 = vrot.lane.b32.xlu0 %v349, 96
      %v390 = vpop.permute.xlu0 %389
      %392 = vst.msk [vmem:[%s231 + $0x8] sm:$0xf] %vm351, %v390
      %394 = vst.msk [vmem:[%s231 + $0x8] sm:$0xf] %vm363, %v359
      %395 = vrot.lane.b32.xlu0 %v371, 32
      %v396 = vpop.permute.xlu0 %395
      %398 = vst.msk [vmem:[%s231 + $0x8] sm:$0xf] %vm375, %v396
      %399 = vrot.lane.b32.xlu0 %v383, 64
      %v400 = vpop.permute.xlu0 %399
      %402 = vst.msk [vmem:[%s231 + $0x8] sm:$0xf] %vm387, %v400
      %vm403 = vcmask 1045509
      %v404 = vsel %vm403, %v341, %v340
      %vm405 = vcmask 1046534
      %v406 = vsel %vm405, %v342, %v404
      %vm407 = vcmask 1047559
      %v408 = vsel %vm407, %v343, %v406
      %409 = vrot.lane.b32.xlu0 %v408, 64
      %v410 = vpop.permute.xlu0 %409
      %vm412 = vcmask 261124
      %413 = vst.msk [vmem:[%s231] sm:$0xf0] %vm412, %v410
      %v414 = vsel %vm403, %v354, %v353
      %v415 = vsel %vm405, %v355, %v414
      %v416 = vsel %vm407, %v356, %v415
      %417 = vrot.lane.b32.xlu0 %v416, 96
      %v418 = vpop.permute.xlu0 %417
      %vm420 = vcmask 523524
      %421 = vst.msk [vmem:[%s231] sm:$0xf0] %vm420, %v418
      %v422 = vsel %vm403, %v366, %v365
      %v423 = vsel %vm405, %v367, %v422
      %v424 = vsel %vm407, %v368, %v423
      %vm426 = vcmask 785924
      %427 = vst.msk [vmem:[%s231] sm:$0xf0] %vm426, %v424
      %v428 = vsel %vm403, %v378, %v377
      %v429 = vsel %vm405, %v379, %v428
      %v430 = vsel %vm407, %v380, %v429
      %431 = vrot.lane.b32.xlu0 %v430, 32
      %v432 = vpop.permute.xlu0 %431
      %vm434 = vcmask 1048324
      %435 = vst.msk [vmem:[%s231] sm:$0xf0] %vm434, %v432
      %436 = vrot.lane.b32.xlu0 %v408, 32
      %v437 = vpop.permute.xlu0 %436
      %439 = vst.msk [vmem:[%s231 + $0x8] sm:$0xf0] %vm412, %v437
      %440 = vrot.lane.b32.xlu0 %v416, 64
      %v441 = vpop.permute.xlu0 %440
      %443 = vst.msk [vmem:[%s231 + $0x8] sm:$0xf0] %vm420, %v441
      %444 = vrot.lane.b32.xlu0 %v424, 96
      %v445 = vpop.permute.xlu0 %444
      %447 = vst.msk [vmem:[%s231 + $0x8] sm:$0xf0] %vm426, %v445
      %449 = vst.msk [vmem:[%s231 + $0x8] sm:$0xf0] %vm434, %v430
      %s450 = scalar_lea.vmem %s224, 16
      %v451 = vld [vmem:[%s450] sm:$0xff]
      %v452 = vld [vmem:[%s450 + $0x8] sm:$0xff]
      %v453 = vsel %vm242, %v451, 0.0
      %454 = vadd.xlane.f32.xlu0 %v453
      %v455 = vpop.xlane.xlu0 %454
      %v456 = vsel %vm242, %v452, 0.0
      %457 = vadd.xlane.f32.xlu0 %v456
      %v458 = vpop.xlane.xlu0 %457
      %v459 = vmul.f32 %v455, %v255
      %v460 = vmul.f32 %v458, %v255
      %v461 = vsub.f32 %v451, %v459
      %v462 = vsub.f32 %v452, %v460
      %v463 = vmul.f32 %v461, %v461
      %v464 = vmul.f32 %v462, %v462
      %v465 = vsel %vm242, %v463, 0.0
      %466 = vadd.xlane.f32.xlu0 %v465
      %v467 = vpop.xlane.xlu0 %466
      %v468 = vsel %vm242, %v464, 0.0
      %469 = vadd.xlane.f32.xlu0 %v468
      %v470 = vpop.xlane.xlu0 %469
      %v471 = vmul.f32 %v467, %v255
      %v472 = vmul.f32 %v470, %v255
      %v473 = vadd.f32 %v471, 1e-05
      %v474 = vadd.f32 %v472, 1e-05
      %v475 = vrsqrt.pop %v473
      %v476 = vmul.f32 %v475, %v473
      %v477 = vmul.f32 %v476, %v475
      %v478 = vmul.f32 0.5, %v477
      %v479 = vsub.f32 1.5, %v478
      %v480 = vmul.f32 %v475, %v479
      %vm481 = vweird.f32 %v473
      %vm482 = vweird.f32 %v475
      %vm483 = vmor %vm481, %vm482
      %v484 = vsel %vm483, %v475, %v480
      %v485 = vrsqrt.pop %v474
      %v486 = vmul.f32 %v485, %v474
      %v487 = vmul.f32 %v486, %v485
      %v488 = vmul.f32 0.5, %v487
      %v489 = vsub.f32 1.5, %v488
      %v490 = vmul.f32 %v485, %v489
      %vm491 = vweird.f32 %v474
      %vm492 = vweird.f32 %v485
      %vm493 = vmor %vm491, %vm492
      %v494 = vsel %vm493, %v485, %v490
      %v495 = vmul.f32 %v461, %v484
      %v496 = vmul.f32 %v462, %v494
      %v497 = vmul.f32 %v495, %v295
      %v498 = vmul.f32 %v496, %v295
      %v499 = vadd.f32 %v497, %v300
      %v500 = vadd.f32 %v498, %v300
      %v502 = vsel %vm242, %v499, 0
      %v505 = vsel %vm242, %v500, 0
      %507 = vmatpush.msra.mxu0 0.0
      %508 = vmatpush.msra.mxu0 0.0
      %509 = vmatpush.msra.mxu0 0.0
      %510 = vmatpush.msra.mxu0 0.0
      %511 = vmatpush.msra.mxu0 0.0
      %512 = vmatpush.msra.mxu0 0.0
      %513 = vmatpush.msra.mxu0 0.0
      %514 = vmatpush.msra.mxu0 0.0
      %515 = vmatpush.msra.mxu0 0.0
      %516 = vmatpush.msra.mxu0 0.0
      %517 = vmatpush.msra.mxu0 0.0
      %518 = vmatpush.msra.mxu0 0.0
      %519 = vmatpush.msra.mxu0 %v238
      %520 = vmatpush.msra.mxu0 %v237
      %521 = vmatpush.msra.mxu0 %v236
      %522 = vmatpush.msra.mxu0 %v235
      %523 = vmatmul.f32.gmra.mxu0 %v502
      %v524 = vpop.f32.mrf.mxu0
      %v525 = vadd.f32 %v305, %v524
      %526 = vmatmul.f32.gmra.mxu0 %v505
      %v527 = vpop.f32.mrf.mxu0
      %v528 = vadd.f32 %v305, %v527
      %529 = vdwg.mxu0
      %v532 = vrot.slane %v525, 4
      %v533 = vrot.slane %v528, 4
      %v534 = vperm.slane %v525, 0
      %v535 = vperm.slane %v532, 0
      %v536 = vperm.slane %v528, 0
      %v537 = vperm.slane %v533, 0
      %v538 = vsel %vm344, %v535, %v534
      %v539 = vsel %vm346, %v536, %v538
      %v540 = vsel %vm348, %v537, %v539
      %s542 = scalar_lea.vmem %s231, 16
      %543 = vst.msk [vmem:[%s542] sm:$0xf] %vm351, %v540
      %v544 = vperm.slane %v525, 1
      %v545 = vperm.slane %v532, 1
      %v546 = vperm.slane %v528, 1
      %v547 = vperm.slane %v533, 1
      %v548 = vsel %vm344, %v545, %v544
      %v549 = vsel %vm346, %v546, %v548
      %v550 = vsel %vm348, %v547, %v549
      %551 = vrot.lane.b32.xlu0 %v550, 32
      %v552 = vpop.permute.xlu0 %551
      %554 = vst.msk [vmem:[%s542] sm:$0xf] %vm363, %v552
      %v555 = vperm.slane %v525, 2
      %v556 = vperm.slane %v532, 2
      %v557 = vperm.slane %v528, 2
      %v558 = vperm.slane %v533, 2
      %v559 = vsel %vm344, %v556, %v555
      %v560 = vsel %vm346, %v557, %v559
      %v561 = vsel %vm348, %v558, %v560
      %562 = vrot.lane.b32.xlu0 %v561, 64
      %v563 = vpop.permute.xlu0 %562
      %565 = vst.msk [vmem:[%s542] sm:$0xf] %vm375, %v563
      %v566 = vperm.slane %v525, 3
      %v567 = vperm.slane %v532, 3
      %v568 = vperm.slane %v528, 3
      %v569 = vperm.slane %v533, 3
      %v570 = vsel %vm344, %v567, %v566
      %v571 = vsel %vm346, %v568, %v570
      %v572 = vsel %vm348, %v569, %v571
      %573 = vrot.lane.b32.xlu0 %v572, 96
      %v574 = vpop.permute.xlu0 %573
      %576 = vst.msk [vmem:[%s542] sm:$0xf] %vm387, %v574
      %577 = vrot.lane.b32.xlu0 %v540, 96
      %v578 = vpop.permute.xlu0 %577
      %580 = vst.msk [vmem:[%s542 + $0x8] sm:$0xf] %vm351, %v578
      %582 = vst.msk [vmem:[%s542 + $0x8] sm:$0xf] %vm363, %v550
      %583 = vrot.lane.b32.xlu0 %v561, 32
      %v584 = vpop.permute.xlu0 %583
      %586 = vst.msk [vmem:[%s542 + $0x8] sm:$0xf] %vm375, %v584
      %587 = vrot.lane.b32.xlu0 %v572, 64
      %v588 = vpop.permute.xlu0 %587
      %590 = vst.msk [vmem:[%s542 + $0x8] sm:$0xf] %vm387, %v588
      %v591 = vsel %vm403, %v535, %v534
      %v592 = vsel %vm405, %v536, %v591
      %v593 = vsel %vm407, %v537, %v592
      %594 = vrot.lane.b32.xlu0 %v593, 64
      %v595 = vpop.permute.xlu0 %594
      %597 = vst.msk [vmem:[%s542] sm:$0xf0] %vm412, %v595
      %v598 = vsel %vm403, %v545, %v544
      %v599 = vsel %vm405, %v546, %v598
      %v600 = vsel %vm407, %v547, %v599
      %601 = vrot.lane.b32.xlu0 %v600, 96
      %v602 = vpop.permute.xlu0 %601
      %604 = vst.msk [vmem:[%s542] sm:$0xf0] %vm420, %v602
      %v605 = vsel %vm403, %v556, %v555
      %v606 = vsel %vm405, %v557, %v605
      %v607 = vsel %vm407, %v558, %v606
      %609 = vst.msk [vmem:[%s542] sm:$0xf0] %vm426, %v607
      %v610 = vsel %vm403, %v567, %v566
      %v611 = vsel %vm405, %v568, %v610
      %v612 = vsel %vm407, %v569, %v611
      %613 = vrot.lane.b32.xlu0 %v612, 32
      %v614 = vpop.permute.xlu0 %613
      %616 = vst.msk [vmem:[%s542] sm:$0xf0] %vm434, %v614
      %617 = vrot.lane.b32.xlu0 %v593, 32
      %v618 = vpop.permute.xlu0 %617
      %620 = vst.msk [vmem:[%s542 + $0x8] sm:$0xf0] %vm412, %v618
      %621 = vrot.lane.b32.xlu0 %v600, 64
      %v622 = vpop.permute.xlu0 %621
      %624 = vst.msk [vmem:[%s542 + $0x8] sm:$0xf0] %vm420, %v622
      %625 = vrot.lane.b32.xlu0 %v607, 96
      %v626 = vpop.permute.xlu0 %625
      %628 = vst.msk [vmem:[%s542 + $0x8] sm:$0xf0] %vm426, %v626
      %630 = vst.msk [vmem:[%s542 + $0x8] sm:$0xf0] %vm434, %v612
      %s631 = scalar_lea.vmem %s224, 32
      %v632 = vld [vmem:[%s631] sm:$0xff]
      %v633 = vld [vmem:[%s631 + $0x8] sm:$0xff]
      %v634 = vsel %vm242, %v632, 0.0
      %635 = vadd.xlane.f32.xlu0 %v634
      %v636 = vpop.xlane.xlu0 %635
      %v637 = vsel %vm242, %v633, 0.0
      %638 = vadd.xlane.f32.xlu0 %v637
      %v639 = vpop.xlane.xlu0 %638
      %v640 = vmul.f32 %v636, %v255
      %v641 = vmul.f32 %v639, %v255
      %v642 = vsub.f32 %v632, %v640
      %v643 = vsub.f32 %v633, %v641
      %v644 = vmul.f32 %v642, %v642
      %v645 = vmul.f32 %v643, %v643
      %v646 = vsel %vm242, %v644, 0.0
      %647 = vadd.xlane.f32.xlu0 %v646
      %v648 = vpop.xlane.xlu0 %647
      %v649 = vsel %vm242, %v645, 0.0
      %650 = vadd.xlane.f32.xlu0 %v649
      %v651 = vpop.xlane.xlu0 %650
      %v652 = vmul.f32 %v648, %v255
      %v653 = vmul.f32 %v651, %v255
      %v654 = vadd.f32 %v652, 1e-05
      %v655 = vadd.f32 %v653, 1e-05
      %v656 = vrsqrt.pop %v654
      %v657 = vmul.f32 %v656, %v654
      %v658 = vmul.f32 %v657, %v656
      %v659 = vmul.f32 0.5, %v658
      %v660 = vsub.f32 1.5, %v659
      %v661 = vmul.f32 %v656, %v660
      %vm662 = vweird.f32 %v654
      %vm663 = vweird.f32 %v656
      %vm664 = vmor %vm662, %vm663
      %v665 = vsel %vm664, %v656, %v661
      %v666 = vrsqrt.pop %v655
      %v667 = vmul.f32 %v666, %v655
      %v668 = vmul.f32 %v667, %v666
      %v669 = vmul.f32 0.5, %v668
      %v670 = vsub.f32 1.5, %v669
      %v671 = vmul.f32 %v666, %v670
      %vm672 = vweird.f32 %v655
      %vm673 = vweird.f32 %v666
      %vm674 = vmor %vm672, %vm673
      %v675 = vsel %vm674, %v666, %v671
      %v676 = vmul.f32 %v642, %v665
      %v677 = vmul.f32 %v643, %v675
      %v678 = vmul.f32 %v676, %v295
      %v679 = vmul.f32 %v677, %v295
      %v680 = vadd.f32 %v678, %v300
      %v681 = vadd.f32 %v679, %v300
      %v683 = vsel %vm242, %v680, 0
      %v686 = vsel %vm242, %v681, 0
      %688 = vmatpush.msra.mxu0 0.0
      %689 = vmatpush.msra.mxu0 0.0
      %690 = vmatpush.msra.mxu0 0.0
      %691 = vmatpush.msra.mxu0 0.0
      %692 = vmatpush.msra.mxu0 0.0
      %693 = vmatpush.msra.mxu0 0.0
      %694 = vmatpush.msra.mxu0 0.0
      %695 = vmatpush.msra.mxu0 0.0
      %696 = vmatpush.msra.mxu0 0.0
      %697 = vmatpush.msra.mxu0 0.0
      %698 = vmatpush.msra.mxu0 0.0
      %699 = vmatpush.msra.mxu0 0.0
      %700 = vmatpush.msra.mxu0 %v238
      %701 = vmatpush.msra.mxu0 %v237
      %702 = vmatpush.msra.mxu0 %v236
      %703 = vmatpush.msra.mxu0 %v235
      %704 = vmatmul.f32.gmra.mxu0 %v683
      %v705 = vpop.f32.mrf.mxu0
      %v706 = vadd.f32 %v305, %v705
      %707 = vmatmul.f32.gmra.mxu0 %v686
      %v708 = vpop.f32.mrf.mxu0
      %v709 = vadd.f32 %v305, %v708
      %710 = vdwg.mxu0
      %v713 = vrot.slane %v706, 4
      %v714 = vrot.slane %v709, 4
      %v715 = vperm.slane %v706, 0
      %v716 = vperm.slane %v713, 0
      %v717 = vperm.slane %v709, 0
      %v718 = vperm.slane %v714, 0
      %v719 = vsel %vm344, %v716, %v715
      %v720 = vsel %vm346, %v717, %v719
      %v721 = vsel %vm348, %v718, %v720
      %s723 = scalar_lea.vmem %s231, 32
      %724 = vst.msk [vmem:[%s723] sm:$0xf] %vm351, %v721
      %v725 = vperm.slane %v706, 1
      %v726 = vperm.slane %v713, 1
      %v727 = vperm.slane %v709, 1
      %v728 = vperm.slane %v714, 1
      %v729 = vsel %vm344, %v726, %v725
      %v730 = vsel %vm346, %v727, %v729
      %v731 = vsel %vm348, %v728, %v730
      %732 = vrot.lane.b32.xlu0 %v731, 32
      %v733 = vpop.permute.xlu0 %732
      %735 = vst.msk [vmem:[%s723] sm:$0xf] %vm363, %v733
      %v736 = vperm.slane %v706, 2
      %v737 = vperm.slane %v713, 2
      %v738 = vperm.slane %v709, 2
      %v739 = vperm.slane %v714, 2
      %v740 = vsel %vm344, %v737, %v736
      %v741 = vsel %vm346, %v738, %v740
      %v742 = vsel %vm348, %v739, %v741
      %743 = vrot.lane.b32.xlu0 %v742, 64
      %v744 = vpop.permute.xlu0 %743
      %746 = vst.msk [vmem:[%s723] sm:$0xf] %vm375, %v744
      %v747 = vperm.slane %v706, 3
      %v748 = vperm.slane %v713, 3
      %v749 = vperm.slane %v709, 3
      %v750 = vperm.slane %v714, 3
      %v751 = vsel %vm344, %v748, %v747
      %v752 = vsel %vm346, %v749, %v751
      %v753 = vsel %vm348, %v750, %v752
      %754 = vrot.lane.b32.xlu0 %v753, 96
      %v755 = vpop.permute.xlu0 %754
      %757 = vst.msk [vmem:[%s723] sm:$0xf] %vm387, %v755
      %758 = vrot.lane.b32.xlu0 %v721, 96
      %v759 = vpop.permute.xlu0 %758
      %761 = vst.msk [vmem:[%s723 + $0x8] sm:$0xf] %vm351, %v759
      %763 = vst.msk [vmem:[%s723 + $0x8] sm:$0xf] %vm363, %v731
      %764 = vrot.lane.b32.xlu0 %v742, 32
      %v765 = vpop.permute.xlu0 %764
      %767 = vst.msk [vmem:[%s723 + $0x8] sm:$0xf] %vm375, %v765
      %768 = vrot.lane.b32.xlu0 %v753, 64
      %v769 = vpop.permute.xlu0 %768
      %771 = vst.msk [vmem:[%s723 + $0x8] sm:$0xf] %vm387, %v769
      %v772 = vsel %vm403, %v716, %v715
      %v773 = vsel %vm405, %v717, %v772
      %v774 = vsel %vm407, %v718, %v773
      %775 = vrot.lane.b32.xlu0 %v774, 64
      %v776 = vpop.permute.xlu0 %775
      %778 = vst.msk [vmem:[%s723] sm:$0xf0] %vm412, %v776
      %v779 = vsel %vm403, %v726, %v725
      %v780 = vsel %vm405, %v727, %v779
      %v781 = vsel %vm407, %v728, %v780
      %782 = vrot.lane.b32.xlu0 %v781, 96
      %v783 = vpop.permute.xlu0 %782
      %785 = vst.msk [vmem:[%s723] sm:$0xf0] %vm420, %v783
      %v786 = vsel %vm403, %v737, %v736
      %v787 = vsel %vm405, %v738, %v786
      %v788 = vsel %vm407, %v739, %v787
      %790 = vst.msk [vmem:[%s723] sm:$0xf0] %vm426, %v788
      %v791 = vsel %vm403, %v748, %v747
      %v792 = vsel %vm405, %v749, %v791
      %v793 = vsel %vm407, %v750, %v792
      %794 = vrot.lane.b32.xlu0 %v793, 32
      %v795 = vpop.permute.xlu0 %794
      %797 = vst.msk [vmem:[%s723] sm:$0xf0] %vm434, %v795
      %798 = vrot.lane.b32.xlu0 %v774, 32
      %v799 = vpop.permute.xlu0 %798
      %801 = vst.msk [vmem:[%s723 + $0x8] sm:$0xf0] %vm412, %v799
      %802 = vrot.lane.b32.xlu0 %v781, 64
      %v803 = vpop.permute.xlu0 %802
      %805 = vst.msk [vmem:[%s723 + $0x8] sm:$0xf0] %vm420, %v803
      %806 = vrot.lane.b32.xlu0 %v788, 96
      %v807 = vpop.permute.xlu0 %806
      %809 = vst.msk [vmem:[%s723 + $0x8] sm:$0xf0] %vm426, %v807
      %811 = vst.msk [vmem:[%s723 + $0x8] sm:$0xf0] %vm434, %v793
      %s812 = scalar_lea.vmem %s224, 48
      %v813 = vld [vmem:[%s812] sm:$0xff]
      %v814 = vld [vmem:[%s812 + $0x8] sm:$0xff]
      %v815 = vsel %vm242, %v813, 0.0
      %816 = vadd.xlane.f32.xlu0 %v815
      %v817 = vpop.xlane.xlu0 %816
      %v818 = vsel %vm242, %v814, 0.0
      %819 = vadd.xlane.f32.xlu0 %v818
      %v820 = vpop.xlane.xlu0 %819
      %v821 = vmul.f32 %v817, %v255
      %v822 = vmul.f32 %v820, %v255
      %v823 = vsub.f32 %v813, %v821
      %v824 = vsub.f32 %v814, %v822
      %v825 = vmul.f32 %v823, %v823
      %v826 = vmul.f32 %v824, %v824
      %v827 = vsel %vm242, %v825, 0.0
      %828 = vadd.xlane.f32.xlu0 %v827
      %v829 = vpop.xlane.xlu0 %828
      %v830 = vsel %vm242, %v826, 0.0
      %831 = vadd.xlane.f32.xlu0 %v830
      %v832 = vpop.xlane.xlu0 %831
      %v833 = vmul.f32 %v829, %v255
      %v834 = vmul.f32 %v832, %v255
      %v835 = vadd.f32 %v833, 1e-05
      %v836 = vadd.f32 %v834, 1e-05
      %v837 = vrsqrt.pop %v835
      %v838 = vmul.f32 %v837, %v835
      %v839 = vmul.f32 %v838, %v837
      %v840 = vmul.f32 0.5, %v839
      %v841 = vsub.f32 1.5, %v840
      %v842 = vmul.f32 %v837, %v841
      %vm843 = vweird.f32 %v835
      %vm844 = vweird.f32 %v837
      %vm845 = vmor %vm843, %vm844
      %v846 = vsel %vm845, %v837, %v842
      %v847 = vrsqrt.pop %v836
      %v848 = vmul.f32 %v847, %v836
      %v849 = vmul.f32 %v848, %v847
      %v850 = vmul.f32 0.5, %v849
      %v851 = vsub.f32 1.5, %v850
      %v852 = vmul.f32 %v847, %v851
      %vm853 = vweird.f32 %v836
      %vm854 = vweird.f32 %v847
      %vm855 = vmor %vm853, %vm854
      %v856 = vsel %vm855, %v847, %v852
      %v857 = vmul.f32 %v823, %v846
      %v858 = vmul.f32 %v824, %v856
      %v859 = vmul.f32 %v857, %v295
      %v860 = vmul.f32 %v858, %v295
      %v861 = vadd.f32 %v859, %v300
      %v862 = vadd.f32 %v860, %v300
      %v864 = vsel %vm242, %v861, 0
      %v867 = vsel %vm242, %v862, 0
      %869 = vmatpush.msra.mxu0 0.0
      %870 = vmatpush.msra.mxu0 0.0
      %871 = vmatpush.msra.mxu0 0.0
      %872 = vmatpush.msra.mxu0 0.0
      %873 = vmatpush.msra.mxu0 0.0
      %874 = vmatpush.msra.mxu0 0.0
      %875 = vmatpush.msra.mxu0 0.0
      %876 = vmatpush.msra.mxu0 0.0
      %877 = vmatpush.msra.mxu0 0.0
      %878 = vmatpush.msra.mxu0 0.0
      %879 = vmatpush.msra.mxu0 0.0
      %880 = vmatpush.msra.mxu0 0.0
      %881 = vmatpush.msra.mxu0 %v238
      %882 = vmatpush.msra.mxu0 %v237
      %883 = vmatpush.msra.mxu0 %v236
      %884 = vmatpush.msra.mxu0 %v235
      %885 = vmatmul.f32.gmra.mxu0 %v864
      %v886 = vpop.f32.mrf.mxu0
      %v887 = vadd.f32 %v305, %v886
      %888 = vmatmul.f32.gmra.mxu0 %v867
      %v889 = vpop.f32.mrf.mxu0
      %v890 = vadd.f32 %v305, %v889
      %891 = vdwg.mxu0
      %v894 = vrot.slane %v887, 4
      %v895 = vrot.slane %v890, 4
      %v896 = vperm.slane %v887, 0
      %v897 = vperm.slane %v894, 0
      %v898 = vperm.slane %v890, 0
      %v899 = vperm.slane %v895, 0
      %v900 = vsel %vm344, %v897, %v896
      %v901 = vsel %vm346, %v898, %v900
      %v902 = vsel %vm348, %v899, %v901
      %s904 = scalar_lea.vmem %s231, 48
      %905 = vst.msk [vmem:[%s904] sm:$0xf] %vm351, %v902
      %v906 = vperm.slane %v887, 1
      %v907 = vperm.slane %v894, 1
      %v908 = vperm.slane %v890, 1
      %v909 = vperm.slane %v895, 1
      %v910 = vsel %vm344, %v907, %v906
      %v911 = vsel %vm346, %v908, %v910
      %v912 = vsel %vm348, %v909, %v911
      %913 = vrot.lane.b32.xlu0 %v912, 32
      %v914 = vpop.permute.xlu0 %913
      %916 = vst.msk [vmem:[%s904] sm:$0xf] %vm363, %v914
      %v917 = vperm.slane %v887, 2
      %v918 = vperm.slane %v894, 2
      %v919 = vperm.slane %v890, 2
      %v920 = vperm.slane %v895, 2
      %v921 = vsel %vm344, %v918, %v917
      %v922 = vsel %vm346, %v919, %v921
      %v923 = vsel %vm348, %v920, %v922
      %924 = vrot.lane.b32.xlu0 %v923, 64
      %v925 = vpop.permute.xlu0 %924
      %927 = vst.msk [vmem:[%s904] sm:$0xf] %vm375, %v925
      %v928 = vperm.slane %v887, 3
      %v929 = vperm.slane %v894, 3
      %v930 = vperm.slane %v890, 3
      %v931 = vperm.slane %v895, 3
      %v932 = vsel %vm344, %v929, %v928
      %v933 = vsel %vm346, %v930, %v932
      %v934 = vsel %vm348, %v931, %v933
      %935 = vrot.lane.b32.xlu0 %v934, 96
      %v936 = vpop.permute.xlu0 %935
      %938 = vst.msk [vmem:[%s904] sm:$0xf] %vm387, %v936
      %939 = vrot.lane.b32.xlu0 %v902, 96
      %v940 = vpop.permute.xlu0 %939
      %942 = vst.msk [vmem:[%s904 + $0x8] sm:$0xf] %vm351, %v940
      %944 = vst.msk [vmem:[%s904 + $0x8] sm:$0xf] %vm363, %v912
      %945 = vrot.lane.b32.xlu0 %v923, 32
      %v946 = vpop.permute.xlu0 %945
      %948 = vst.msk [vmem:[%s904 + $0x8] sm:$0xf] %vm375, %v946
      %949 = vrot.lane.b32.xlu0 %v934, 64
      %v950 = vpop.permute.xlu0 %949
      %952 = vst.msk [vmem:[%s904 + $0x8] sm:$0xf] %vm387, %v950
      %v953 = vsel %vm403, %v897, %v896
      %v954 = vsel %vm405, %v898, %v953
      %v955 = vsel %vm407, %v899, %v954
      %956 = vrot.lane.b32.xlu0 %v955, 64
      %v957 = vpop.permute.xlu0 %956
      %959 = vst.msk [vmem:[%s904] sm:$0xf0] %vm412, %v957
      %v960 = vsel %vm403, %v907, %v906
      %v961 = vsel %vm405, %v908, %v960
      %v962 = vsel %vm407, %v909, %v961
      %963 = vrot.lane.b32.xlu0 %v962, 96
      %v964 = vpop.permute.xlu0 %963
      %966 = vst.msk [vmem:[%s904] sm:$0xf0] %vm420, %v964
      %v967 = vsel %vm403, %v918, %v917
      %v968 = vsel %vm405, %v919, %v967
      %v969 = vsel %vm407, %v920, %v968
      %971 = vst.msk [vmem:[%s904] sm:$0xf0] %vm426, %v969
      %v972 = vsel %vm403, %v929, %v928
      %v973 = vsel %vm405, %v930, %v972
      %v974 = vsel %vm407, %v931, %v973
      %975 = vrot.lane.b32.xlu0 %v974, 32
      %v976 = vpop.permute.xlu0 %975
      %978 = vst.msk [vmem:[%s904] sm:$0xf0] %vm434, %v976
      %979 = vrot.lane.b32.xlu0 %v955, 32
      %v980 = vpop.permute.xlu0 %979
      %982 = vst.msk [vmem:[%s904 + $0x8] sm:$0xf0] %vm412, %v980
      %983 = vrot.lane.b32.xlu0 %v962, 64
      %v984 = vpop.permute.xlu0 %983
      %986 = vst.msk [vmem:[%s904 + $0x8] sm:$0xf0] %vm420, %v984
      %987 = vrot.lane.b32.xlu0 %v969, 96
      %v988 = vpop.permute.xlu0 %987
      %990 = vst.msk [vmem:[%s904 + $0x8] sm:$0xf0] %vm426, %v988
      %992 = vst.msk [vmem:[%s904 + $0x8] sm:$0xf0] %vm434, %v974
      %s993 = smul.u32 4, %s16
      %p994 = scmp.lt.s32.totalorder %s993, 7
      %s995 = scalar_select %p994, %s993, 7
      %s996 = smul.addr %s995, 2
      %s997 = smul.addr %s996, 8
      %s998 = scalar_lea.vmem %s5, %s997
      // Predicated region
      $region41: #{patch_expanding_pallas.1} parent=39 // pred_check
        %p999 = pneg %p144
      $region42: #{patch_expanding_pallas.1} parent=39 // pred_check_branch
        %1001 = sbr.rel (%p999) target = $region44
      $region43: #{patch_expanding_pallas.1} parent=39 // pred_region
        %s1002 = smul.u32 4, %s16
      $region44: #{patch_expanding_pallas.1} parent=39 // pred_fallthru
        _
    $region40: #{patch_expanding_pallas.1} parent=5 // pred_fallthru
      _
    %p1003 = scmp.le.s32.totalorder 2, %s11
    // Predicated region
    $region45: #{patch_expanding_pallas.1} parent=5 // pred_check
      %p1004 = pneg %p1003
    $region46: #{patch_expanding_pallas.1} parent=5 // pred_check_branch
      %1006 = sbr.rel (%p1004) target = $region48
    $region47: #{patch_expanding_pallas.1} parent=5 // pred_region
      %s1007 = ssub.s32 %s11, 2
      // Predicated region
      $region49: #{patch_expanding_pallas.1} parent=47 // pred_check
        %p1008 = pneg %p150
      $region50: #{patch_expanding_pallas.1} parent=47 // pred_check_branch
        %1010 = sbr.rel (%p1008) target = $region52
      $region51: #{patch_expanding_pallas.1} parent=47 // pred_region
        %s1011 = smul.u32 4, %s17
        %p1012 = scmp.lt.s32.totalorder %s1011, 7
        %s1013 = scalar_select %p1012, %s1011, 7
        %s1014 = smul.addr %s1013, 2
        %s1015 = smul.addr %s1014, 8
        %s1016 = scalar_lea.vmem %s5, %s1015
      $region52: #{patch_expanding_pallas.1} parent=47 // pred_fallthru
        _
    $region48: #{patch_expanding_pallas.1} parent=5 // pred_fallthru
      _
  $region6: #{patch_expanding_pallas.1} parent=0 // loop_footer
    %s15 = sadd.s32 1, %s11
  $region7: #{patch_expanding_pallas.1} parent=0 // loop_footer_branch
    %10 = sbr.rel target = $region3
  $region8: #{patch_expanding_pallas.1} parent=0 // loop_exit
    _

</llo_original>
